<compile_context>
chip_gen: v7x
topology: tpu7x:2x2x1
jax: 0.10.0
libtpu: 0.0.40
codegen_flags: <defaults>
</compile_context>

<pallas_src>
import numpy as np
import jax
import jax.numpy as jnp
from jax import lax
from jax.experimental import pallas as pl
from jax.experimental.pallas import tpu as pltpu

# ----------------------------- hyperparameters (hyperparams object) -----------------------------
B = 2                  # batch
C0, L0 = 4, 16         # n_channel, input length
C0P = 8                # n_channel zero-padded to a sublane multiple (aligned tap stacking)
C1, C2, C3 = 8, 16, 32             # n_conv_in, n_conv_in2, n_conv_in3
K1 = K2 = K3 = 3                   # conv kernel sizes (stride=1, padding=1, dilation=1)
L1P, L2P, L3P = 8, 4, 2            # lengths after pool1/2/3 (k=2, s=2, p=0, d=1); n_conv_out = 2
H = 32                             # n_Flat_out
OUTPUT_SIZE = 10
NEG_SLOPE = 0.01                   # negative_slope
EPS = 1e-5                         # BatchNorm eps

PCOL_ROWS = 32                     # packed per-channel parameter table: (32, 19)


# ----------------------------------------- Pallas kernel ----------------------------------------
def fcnn_kernel(x_ref, w1_ref, w2_ref, w3_ref, wf1_ref, wf2_ref, pcol_ref, out_ref):
    WPAD = x_ref.shape[1]                       # padded lane width (multiple of 128), static
    bsz = out_ref.shape[1]                      # batch, static
    W = bsz * L0                                # real (unpadded) lane extent

    lane = lax.broadcasted_iota(jnp.int32, (1, WPAD), 1)
    inb = lane < W                              # in-bounds lanes
    pos = lane % L0                             # position within each example

    ptab = pcol_ref[...]                        # (32, 19) packed bias/gamma/beta columns

    def col(idx, n):                            # (n, 1) per-channel column
        return ptab[0:n, idx:idx + 1]

    def leaky(z):
        return jnp.where(z > 0, z, NEG_SLOPE * z)

    def bn(z, g, b, n_valid, mask=None):
        # training-mode BatchNorm over the valid lanes (biased variance)
        zm = z if mask is None else jnp.where(mask, z, 0.0)
        mu = jnp.sum(zm, axis=1, keepdims=True) * (1.0 / n_valid)
        d = z - mu
        dm = d if mask is None else jnp.where(mask, d, 0.0)
        var = jnp.sum(dm * dm, axis=1, keepdims=True) * (1.0 / n_valid)
        return d * lax.rsqrt(var + EPS) * g + b

    def conv_block(h, w_ref_l, base, s, L_cur):
        # Valid data for this stage lives at lanes b*L0 + l*s, l in [0, L_cur).
        # Conv taps = lane rotations (XLU) + iota masks for padding / example boundaries,
        # fused into ONE (Cout, 3*Cin) MXU matmul.
        cout = w_ref_l.shape[0]
        h_m = jnp.where(pos == 0, 0.0, pltpu.roll(h, shift=s, axis=1))              # x[l-1]
        h_p = jnp.where(pos == (L_cur - 1) * s, 0.0,
                        pltpu.roll(h, shift=WPAD - s, axis=1))                      # x[l+1]
        stacked = jnp.concatenate([h_m, h, h_p], axis=0)                            # (3*Cin, WPAD)
        y = jnp.dot(w_ref_l[...], stacked, preferred_element_type=jnp.float32)
        y = y + col(base + 0, cout)
        mask1 = inb if s == 1 else (inb & (pos % s == 0))
        y = leaky(bn(y, col(base + 1, cout), col(base + 2, cout), bsz * L_cur, mask1))
        # MaxPool1d(k=2, s=2): VPU max against the +s lane neighbour; the pooled value for
        # logical l' lands at lane l'*(2s) — no compaction, the valid-lane stride just doubles.
        m = jnp.maximum(y, pltpu.roll(y, shift=WPAD - s, axis=1))
        mask2 = inb & (pos % (2 * s) == 0)
        return leaky(bn(m, col(base + 3, cout), col(base + 4, cout),
                        bsz * (L_cur // 2), mask2))

    h = x_ref[...]                                   # (C0P, WPAD), stride 1
    h = conv_block(h, w1_ref, 0, 1, L0)              # (C1, WPAD), stride 2
    h = conv_block(h, w2_ref, 5, 2, L1P)             # (C2, WPAD), stride 4
    h = conv_block(h, w3_ref, 10, 4, L2P)            # (C3, WPAD), stride 8

    # fc_block: gather the L3P valid lanes per example with an iota-built 0/1 selection matrix,
    # stack along sublanes and do ONE (H, L3P*C3) x (L3P*C3, B) matmul (PyTorch flatten order).
    fstride = L0 // L3P                              # 8
    rows = lax.broadcasted_iota(jnp.int32, (WPAD, bsz), 0)
    bcol = lax.broadcasted_iota(jnp.int32, (WPAD, bsz), 1)
    parts = []
    for l in range(L3P):
        sel = jnp.where(rows == bcol * L0 + l * fstride, 1.0, 0.0)                  # (WPAD, B)
        parts.append(jnp.dot(h, sel, preferred_element_type=jnp.float32))           # (C3, B)
    xf = jnp.concatenate(parts, axis=0)                                             # (L3P*C3, B)
    z = jnp.dot(wf1_ref[...], xf, preferred_element_type=jnp.float32) + col(15, H)
    z = leaky(bn(z, col(16, H), col(17, H), bsz))
    out_ref[...] = (jnp.dot(wf2_ref[...], z, preferred_element_type=jnp.float32)
                    + col(18, OUTPUT_SIZE))


# ------------------------------------------ parameters ------------------------------------------
def init_params(key):
    keys = iter(jax.random.split(key, 64))
    nk = lambda: next(keys)
    p = {}

    def conv(co, ci, ksz):
        w = jax.random.normal(nk(), (co, ci, ksz), jnp.float32) / np.sqrt(ci * ksz)
        b = 0.1 * jax.random.normal(nk(), (co,), jnp.float32)
        return w, b

    def bn(c):
        g = 1.0 + 0.1 * jax.random.normal(nk(), (c,), jnp.float32)
        b = 0.1 * jax.random.normal(nk(), (c,), jnp.float32)
        return g, b

    p['w1'], p['b1'] = conv(C1, C0, K1)
    p['g11'], p['be11'] = bn(C1)
    p['g12'], p['be12'] = bn(C1)
    p['w2'], p['b2'] = conv(C2, C1, K2)
    p['g21'], p['be21'] = bn(C2)
    p['g22'], p['be22'] = bn(C2)
    p['w3'], p['b3'] = conv(C3, C2, K3)
    p['g31'], p['be31'] = bn(C3)
    p['g32'], p['be32'] = bn(C3)
    p['wf1'] = jax.random.normal(nk(), (H, C3 * L3P), jnp.float32) / np.sqrt(C3 * L3P)
    p['bf1'] = 0.1 * jax.random.normal(nk(), (H,), jnp.float32)
    p['gf'], p['bef'] = bn(H)
    p['wf2'] = jax.random.normal(nk(), (OUTPUT_SIZE, H), jnp.float32) / np.sqrt(H)
    p['bf2'] = 0.1 * jax.random.normal(nk(), (OUTPUT_SIZE,), jnp.float32)
    return p


def prepare_params(p):
    """One-time packing of the PyTorch-layout parameters into the kernel's 7 inputs."""
    def fuse_conv(w, cin_pad):
        co, ci, k = w.shape
        wp = jnp.zeros((co, cin_pad, k), jnp.float32).at[:, :ci, :].set(w)
        # contraction order matches concat([x[l-1], x[l], x[l+1]]) along sublanes
        return jnp.transpose(wp, (0, 2, 1)).reshape(co, k * cin_pad)   # (Cout, K*Cin_pad)

    w1f = fuse_conv(p['w1'], C0P)     # (8, 24)
    w2f = fuse_conv(p['w2'], C1)      # (16, 24)
    w3f = fuse_conv(p['w3'], C2)      # (32, 48)
    # Wf1 columns reordered so column l*C3+c multiplies Conv_out3[b, c, l] (PyTorch flatten order)
    wf1p = jnp.transpose(p['wf1'].reshape(H, C3, L3P), (0, 2, 1)).reshape(H, L3P * C3)
    wf2 = p['wf2'].astype(jnp.float32)

    vecs = [p['b1'], p['g11'], p['be11'], p['g12'], p['be12'],
            p['b2'], p['g21'], p['be21'], p['g22'], p['be22'],
            p['b3'], p['g31'], p['be31'], p['g32'], p['be32'],
            p['bf1'], p['gf'], p['bef'], p['bf2']]
    cols = [jnp.zeros((PCOL_ROWS,), jnp.float32).at[:v.shape[0]].set(v) for v in vecs]
    pcol = jnp.stack(cols, axis=1)                                     # (32, 19)
    return (w1f, w2f, w3f, wf1p, wf2, pcol)


# ------------------------------------------- wrapper --------------------------------------------
@jax.jit
def fcnn_forward_pallas(x, packed):
    w1f, w2f, w3f, wf1p, wf2, pcol = packed
    bsz, c0, l0 = x.shape
    wpad = max(128, ((bsz * l0 + 127) // 128) * 128)                   # lane-dense padded width

    x2d = jnp.transpose(x, (1, 0, 2)).reshape(c0, bsz * l0)            # (C0, B*L0)
    x2d = jnp.zeros((C0P, wpad), jnp.float32).at[:c0, :bsz * l0].set(x2d)

    out = pl.pallas_call(
        fcnn_kernel,
        out_shape=jax.ShapeDtypeStruct((OUTPUT_SIZE, bsz), jnp.float32),
        in_specs=[pl.BlockSpec(memory_space=pltpu.MemorySpace.VMEM)] * 7,
        out_specs=pl.BlockSpec(memory_space=pltpu.MemorySpace.VMEM),
    )(x2d, w1f, w2f, w3f, wf1p, wf2, pcol)

    # matches: Lin_out.float().unsqueeze_(2).unsqueeze_(3) -> (B, output_size, 1, 1)
    return jnp.transpose(out).reshape(bsz, OUTPUT_SIZE, 1, 1).astype(jnp.float32)


# ------------------------------------- pure-JAX reference ---------------------------------------
def fcnn_forward_ref(x, p):
    def bn(z, g, b, axes):
        mu = jnp.mean(z, axis=axes, keepdims=True)
        var = jnp.mean((z - mu) ** 2, axis=axes, keepdims=True)
        return (z - mu) / jnp.sqrt(var + EPS) * g + b

    def leaky(z):
        return jnp.where(z > 0, z, NEG_SLOPE * z)

    def block(h, w, bias, g1, b1, g2, b2):
        y = lax.conv_general_dilated(h, w, (1,), [(1, 1)],
                                     dimension_numbers=('NCH', 'OIH', 'NCH'))
        y = y + bias[None, :, None]
        y = leaky(bn(y, g1[None, :, None], b1[None, :, None], (0, 2)))
        pooled = lax.reduce_window(y, -jnp.inf, lax.max, (1, 1, 2), (1, 1, 2), 'VALID')
        return leaky(bn(pooled, g2[None, :, None], b2[None, :, None], (0, 2)))

    h = block(x, p['w1'], p['b1'], p['g11'], p['be11'], p['g12'], p['be12'])
    h = block(h, p['w2'], p['b2'], p['g21'], p['be21'], p['g22'], p['be22'])
    h = block(h, p['w3'], p['b3'], p['g31'], p['be31'], p['g32'], p['be32'])
    flat = h.reshape(h.shape[0], -1)
    z = flat @ p['wf1'].T + p['bf1']
    z = leaky(bn(z, p['gf'], p['bef'], (0,)))
    out = z @ p['wf2'].T + p['bf2']
    return out[:, :, None, None].astype(jnp.float32)


# --------------------------------------------- main ---------------------------------------------
if __name__ == "__main__":
    key = jax.random.PRNGKey(0)
    kx, kp = jax.random.split(key)
    x = jax.random.normal(kx, (B, C0, L0), jnp.float32)   # PyTorch Conv1d layout: (N, C, L)
    params = init_params(kp)

    packed = prepare_params(params)                       # one-time packing (hoisted out of fwd)
    out = fcnn_forward_pallas(x, packed)
    out = jax.block_until_ready(out)

    ref = fcnn_forward_ref(x, params)
    assert out.shape == (B, OUTPUT_SIZE, 1, 1), out.shape
    np.testing.assert_allclose(np.asarray(out), np.asarray(ref), rtol=1e-4, atol=1e-4)
    print("KERNEL_OK")
</pallas_src>

<mosaic_0001>
module attributes {stable_mosaic.version = 11 : i64} {
  func.func @fcnn_kernel(%arg0: memref<8x128xf32, #tpu.memory_space<vmem>>, %arg1: memref<8x24xf32, #tpu.memory_space<vmem>>, %arg2: memref<16x24xf32, #tpu.memory_space<vmem>>, %arg3: memref<32x48xf32, #tpu.memory_space<vmem>>, %arg4: memref<32x64xf32, #tpu.memory_space<vmem>>, %arg5: memref<10x32xf32, #tpu.memory_space<vmem>>, %arg6: memref<32x19xf32, #tpu.memory_space<vmem>>, %arg7: memref<10x2xf32, #tpu.memory_space<vmem>>) attributes {dimension_semantics = [], scalar_prefetch = 0 : i64, scratch_operands = 0 : i64, tpu.core_type = #tpu.core_type<tc>} {
    %0 = tpu.iota {dimensions = array<i32: 1>} : vector<1x128xi32>
    %c32_i32 = arith.constant 32 : i32
    %1 = vector.broadcast %c32_i32 : i32 to vector<1x128xi32>
    %2 = arith.cmpi slt, %0, %1 : vector<1x128xi32>
    %c16_i32 = arith.constant 16 : i32
    %c0_i32 = arith.constant 0 : i32
    %3 = arith.cmpi eq, %c16_i32, %c0_i32 : i32
    %c1_i32 = arith.constant 1 : i32
    %4 = arith.select %3, %c1_i32, %c16_i32 : i32
    %5 = vector.broadcast %4 : i32 to vector<1x128xi32>
    %6 = arith.remsi %0, %5 : vector<1x128xi32>
    %c0_i32_0 = arith.constant 0 : i32
    %7 = vector.broadcast %c0_i32_0 : i32 to vector<1x128xi32>
    %8 = arith.cmpi ne, %6, %7 : vector<1x128xi32>
    %c0_i32_1 = arith.constant 0 : i32
    %9 = vector.broadcast %c0_i32_1 : i32 to vector<1x128xi32>
    %10 = arith.cmpi slt, %6, %9 : vector<1x128xi32>
    %c0_i32_2 = arith.constant 0 : i32
    %11 = arith.cmpi slt, %4, %c0_i32_2 : i32
    %12 = vector.broadcast %11 : i1 to vector<1x128xi1>
    %13 = vector.broadcast %12 : vector<1x128xi1> to vector<1x128xi1>
    %14 = arith.xori %10, %13 : vector<1x128xi1>
    %15 = arith.andi %14, %8 : vector<1x128xi1>
    %16 = vector.broadcast %4 : i32 to vector<1x128xi32>
    %17 = arith.addi %6, %16 : vector<1x128xi32>
    %18 = arith.select %15, %17, %6 : vector<1x128xi1>, vector<1x128xi32>
    %c0 = arith.constant 0 : index
    %c0_3 = arith.constant 0 : index
    %19 = vector.load %arg6[%c0, %c0_3] : memref<32x19xf32, #tpu.memory_space<vmem>>, vector<32x19xf32>
    %c0_4 = arith.constant 0 : index
    %c0_5 = arith.constant 0 : index
    %20 = vector.load %arg0[%c0_4, %c0_5] : memref<8x128xf32, #tpu.memory_space<vmem>>, vector<8x128xf32>
    %c0_i32_6 = arith.constant 0 : i32
    %21 = vector.broadcast %c0_i32_6 : i32 to vector<1x128xi32>
    %22 = arith.cmpi eq, %18, %21 : vector<1x128xi32>
    %c1_i32_7 = arith.constant 1 : i32
    %23 = tpu.dynamic_rotate %20 by %c1_i32_7 dim 1 : vector<8x128xf32>, i32 -> vector<8x128xf32>
    %cst = arith.constant 0.000000e+00 : f32
    %24 = vector.shape_cast %22 : vector<1x128xi1> to vector<1x128xi1>
    %25 = vector.broadcast %24 : vector<1x128xi1> to vector<8x128xi1>
    %26 = vector.broadcast %cst : f32 to vector<8x128xf32>
    %27 = arith.select %25, %26, %23 : vector<8x128xi1>, vector<8x128xf32>
    %c15_i32 = arith.constant 15 : i32
    %28 = vector.broadcast %c15_i32 : i32 to vector<1x128xi32>
    %29 = arith.cmpi eq, %18, %28 : vector<1x128xi32>
    %c127_i32 = arith.constant 127 : i32
    %30 = tpu.dynamic_rotate %20 by %c127_i32 dim 1 : vector<8x128xf32>, i32 -> vector<8x128xf32>
    %cst_8 = arith.constant 0.000000e+00 : f32
    %31 = vector.shape_cast %29 : vector<1x128xi1> to vector<1x128xi1>
    %32 = vector.broadcast %31 : vector<1x128xi1> to vector<8x128xi1>
    %33 = vector.broadcast %cst_8 : f32 to vector<8x128xf32>
    %34 = arith.select %32, %33, %30 : vector<8x128xi1>, vector<8x128xf32>
    %35 = tpu.concatenate %27, %20, %34 in 0 : vector<8x128xf32>, vector<8x128xf32>, vector<8x128xf32> -> vector<24x128xf32>
    %c0_9 = arith.constant 0 : index
    %c0_10 = arith.constant 0 : index
    %36 = vector.load %arg1[%c0_9, %c0_10] : memref<8x24xf32, #tpu.memory_space<vmem>>, vector<8x24xf32>
    %cst_11 = arith.constant dense<0.000000e+00> : vector<8x128xf32>
    %37 = tpu.matmul %36, %35, %cst_11 {dimension_numbers = #tpu.dot_dimension_numbers<[1], [0], [0], [1], [0, 0, 1, 1], [], []>} : vector<8x24xf32>, vector<24x128xf32>, vector<8x128xf32> -> vector<8x128xf32>
    %38 = vector.extract_strided_slice %19 {offsets = [0, 0], sizes = [8, 1], strides = [1, 1]} : vector<32x19xf32> to vector<8x1xf32>
    %39 = vector.broadcast %38 : vector<8x1xf32> to vector<8x128xf32>
    %40 = arith.addf %37, %39 : vector<8x128xf32>
    %41 = vector.extract_strided_slice %19 {offsets = [0, 1], sizes = [8, 1], strides = [1, 1]} : vector<32x19xf32> to vector<8x1xf32>
    %42 = vector.extract_strided_slice %19 {offsets = [0, 2], sizes = [8, 1], strides = [1, 1]} : vector<32x19xf32> to vector<8x1xf32>
    %cst_12 = arith.constant 0.000000e+00 : f32
    %43 = vector.shape_cast %2 : vector<1x128xi1> to vector<1x128xi1>
    %44 = vector.broadcast %43 : vector<1x128xi1> to vector<8x128xi1>
    %45 = vector.broadcast %cst_12 : f32 to vector<8x128xf32>
    %46 = arith.select %44, %40, %45 : vector<8x128xi1>, vector<8x128xf32>
    %cst_13 = arith.constant dense<0.000000e+00> : vector<8xf32>
    %47 = vector.multi_reduction <add>, %46, %cst_13 [1] : vector<8x128xf32> to vector<8xf32>
    %48 = vector.shape_cast %47 : vector<8xf32> to vector<8x1xf32>
    %cst_14 = arith.constant 3.125000e-02 : f32
    %49 = vector.broadcast %cst_14 : f32 to vector<8x1xf32>
    %50 = arith.mulf %48, %49 : vector<8x1xf32>
    %51 = vector.broadcast %50 : vector<8x1xf32> to vector<8x128xf32>
    %52 = arith.subf %40, %51 : vector<8x128xf32>
    %cst_15 = arith.constant 0.000000e+00 : f32
    %53 = vector.shape_cast %2 : vector<1x128xi1> to vector<1x128xi1>
    %54 = vector.broadcast %53 : vector<1x128xi1> to vector<8x128xi1>
    %55 = vector.broadcast %cst_15 : f32 to vector<8x128xf32>
    %56 = arith.select %54, %52, %55 : vector<8x128xi1>, vector<8x128xf32>
    %57 = arith.mulf %56, %56 : vector<8x128xf32>
    %cst_16 = arith.constant dense<0.000000e+00> : vector<8xf32>
    %58 = vector.multi_reduction <add>, %57, %cst_16 [1] : vector<8x128xf32> to vector<8xf32>
    %59 = vector.shape_cast %58 : vector<8xf32> to vector<8x1xf32>
    %cst_17 = arith.constant 3.125000e-02 : f32
    %60 = vector.broadcast %cst_17 : f32 to vector<8x1xf32>
    %61 = arith.mulf %59, %60 : vector<8x1xf32>
    %cst_18 = arith.constant 9.99999974E-6 : f32
    %62 = vector.broadcast %cst_18 : f32 to vector<8x1xf32>
    %63 = arith.addf %61, %62 : vector<8x1xf32>
    %64 = math.rsqrt %63 : vector<8x1xf32>
    %65 = vector.broadcast %64 : vector<8x1xf32> to vector<8x128xf32>
    %66 = arith.mulf %52, %65 : vector<8x128xf32>
    %67 = vector.broadcast %41 : vector<8x1xf32> to vector<8x128xf32>
    %68 = arith.mulf %66, %67 : vector<8x128xf32>
    %69 = vector.broadcast %42 : vector<8x1xf32> to vector<8x128xf32>
    %70 = arith.addf %68, %69 : vector<8x128xf32>
    %cst_19 = arith.constant 0.000000e+00 : f32
    %71 = vector.broadcast %cst_19 : f32 to vector<8x128xf32>
    %72 = arith.cmpf ogt, %70, %71 : vector<8x128xf32>
    %cst_20 = arith.constant 0.00999999977 : f32
    %73 = vector.broadcast %cst_20 : f32 to vector<8x128xf32>
    %74 = arith.mulf %73, %70 : vector<8x128xf32>
    %75 = arith.select %72, %70, %74 : vector<8x128xi1>, vector<8x128xf32>
    %c127_i32_21 = arith.constant 127 : i32
    %76 = tpu.dynamic_rotate %75 by %c127_i32_21 dim 1 : vector<8x128xf32>, i32 -> vector<8x128xf32>
    %77 = arith.maximumf %75, %76 : vector<8x128xf32>
    %c2_i32 = arith.constant 2 : i32
    %c0_i32_22 = arith.constant 0 : i32
    %78 = arith.cmpi eq, %c2_i32, %c0_i32_22 : i32
    %c1_i32_23 = arith.constant 1 : i32
    %79 = arith.select %78, %c1_i32_23, %c2_i32 : i32
    %80 = vector.broadcast %79 : i32 to vector<1x128xi32>
    %81 = arith.remsi %18, %80 : vector<1x128xi32>
    %c0_i32_24 = arith.constant 0 : i32
    %82 = vector.broadcast %c0_i32_24 : i32 to vector<1x128xi32>
    %83 = arith.cmpi ne, %81, %82 : vector<1x128xi32>
    %c0_i32_25 = arith.constant 0 : i32
    %84 = vector.broadcast %c0_i32_25 : i32 to vector<1x128xi32>
    %85 = arith.cmpi slt, %81, %84 : vector<1x128xi32>
    %c0_i32_26 = arith.constant 0 : i32
    %86 = arith.cmpi slt, %79, %c0_i32_26 : i32
    %87 = vector.broadcast %86 : i1 to vector<1x128xi1>
    %88 = vector.broadcast %87 : vector<1x128xi1> to vector<1x128xi1>
    %89 = arith.xori %85, %88 : vector<1x128xi1>
    %90 = arith.andi %89, %83 : vector<1x128xi1>
    %91 = vector.broadcast %79 : i32 to vector<1x128xi32>
    %92 = arith.addi %81, %91 : vector<1x128xi32>
    %93 = arith.select %90, %92, %81 : vector<1x128xi1>, vector<1x128xi32>
    %c0_i32_27 = arith.constant 0 : i32
    %94 = vector.broadcast %c0_i32_27 : i32 to vector<1x128xi32>
    %95 = arith.cmpi eq, %93, %94 : vector<1x128xi32>
    %96 = arith.andi %2, %95 : vector<1x128xi1>
    %97 = vector.extract_strided_slice %19 {offsets = [0, 3], sizes = [8, 1], strides = [1, 1]} : vector<32x19xf32> to vector<8x1xf32>
    %98 = vector.extract_strided_slice %19 {offsets = [0, 4], sizes = [8, 1], strides = [1, 1]} : vector<32x19xf32> to vector<8x1xf32>
    %cst_28 = arith.constant 0.000000e+00 : f32
    %99 = vector.shape_cast %96 : vector<1x128xi1> to vector<1x128xi1>
    %100 = vector.broadcast %99 : vector<1x128xi1> to vector<8x128xi1>
    %101 = vector.broadcast %cst_28 : f32 to vector<8x128xf32>
    %102 = arith.select %100, %77, %101 : vector<8x128xi1>, vector<8x128xf32>
    %cst_29 = arith.constant dense<0.000000e+00> : vector<8xf32>
    %103 = vector.multi_reduction <add>, %102, %cst_29 [1] : vector<8x128xf32> to vector<8xf32>
    %104 = vector.shape_cast %103 : vector<8xf32> to vector<8x1xf32>
    %cst_30 = arith.constant 6.250000e-02 : f32
    %105 = vector.broadcast %cst_30 : f32 to vector<8x1xf32>
    %106 = arith.mulf %104, %105 : vector<8x1xf32>
    %107 = vector.broadcast %106 : vector<8x1xf32> to vector<8x128xf32>
    %108 = arith.subf %77, %107 : vector<8x128xf32>
    %cst_31 = arith.constant 0.000000e+00 : f32
    %109 = vector.shape_cast %96 : vector<1x128xi1> to vector<1x128xi1>
    %110 = vector.broadcast %109 : vector<1x128xi1> to vector<8x128xi1>
    %111 = vector.broadcast %cst_31 : f32 to vector<8x128xf32>
    %112 = arith.select %110, %108, %111 : vector<8x128xi1>, vector<8x128xf32>
    %113 = arith.mulf %112, %112 : vector<8x128xf32>
    %cst_32 = arith.constant dense<0.000000e+00> : vector<8xf32>
    %114 = vector.multi_reduction <add>, %113, %cst_32 [1] : vector<8x128xf32> to vector<8xf32>
    %115 = vector.shape_cast %114 : vector<8xf32> to vector<8x1xf32>
    %cst_33 = arith.constant 6.250000e-02 : f32
    %116 = vector.broadcast %cst_33 : f32 to vector<8x1xf32>
    %117 = arith.mulf %115, %116 : vector<8x1xf32>
    %cst_34 = arith.constant 9.99999974E-6 : f32
    %118 = vector.broadcast %cst_34 : f32 to vector<8x1xf32>
    %119 = arith.addf %117, %118 : vector<8x1xf32>
    %120 = math.rsqrt %119 : vector<8x1xf32>
    %121 = vector.broadcast %120 : vector<8x1xf32> to vector<8x128xf32>
    %122 = arith.mulf %108, %121 : vector<8x128xf32>
    %123 = vector.broadcast %97 : vector<8x1xf32> to vector<8x128xf32>
    %124 = arith.mulf %122, %123 : vector<8x128xf32>
    %125 = vector.broadcast %98 : vector<8x1xf32> to vector<8x128xf32>
    %126 = arith.addf %124, %125 : vector<8x128xf32>
    %cst_35 = arith.constant 0.000000e+00 : f32
    %127 = vector.broadcast %cst_35 : f32 to vector<8x128xf32>
    %128 = arith.cmpf ogt, %126, %127 : vector<8x128xf32>
    %cst_36 = arith.constant 0.00999999977 : f32
    %129 = vector.broadcast %cst_36 : f32 to vector<8x128xf32>
    %130 = arith.mulf %129, %126 : vector<8x128xf32>
    %131 = arith.select %128, %126, %130 : vector<8x128xi1>, vector<8x128xf32>
    %c0_i32_37 = arith.constant 0 : i32
    %132 = vector.broadcast %c0_i32_37 : i32 to vector<1x128xi32>
    %133 = arith.cmpi eq, %18, %132 : vector<1x128xi32>
    %c2_i32_38 = arith.constant 2 : i32
    %134 = tpu.dynamic_rotate %131 by %c2_i32_38 dim 1 : vector<8x128xf32>, i32 -> vector<8x128xf32>
    %cst_39 = arith.constant 0.000000e+00 : f32
    %135 = vector.shape_cast %133 : vector<1x128xi1> to vector<1x128xi1>
    %136 = vector.broadcast %135 : vector<1x128xi1> to vector<8x128xi1>
    %137 = vector.broadcast %cst_39 : f32 to vector<8x128xf32>
    %138 = arith.select %136, %137, %134 : vector<8x128xi1>, vector<8x128xf32>
    %c14_i32 = arith.constant 14 : i32
    %139 = vector.broadcast %c14_i32 : i32 to vector<1x128xi32>
    %140 = arith.cmpi eq, %18, %139 : vector<1x128xi32>
    %c126_i32 = arith.constant 126 : i32
    %141 = tpu.dynamic_rotate %131 by %c126_i32 dim 1 : vector<8x128xf32>, i32 -> vector<8x128xf32>
    %cst_40 = arith.constant 0.000000e+00 : f32
    %142 = vector.shape_cast %140 : vector<1x128xi1> to vector<1x128xi1>
    %143 = vector.broadcast %142 : vector<1x128xi1> to vector<8x128xi1>
    %144 = vector.broadcast %cst_40 : f32 to vector<8x128xf32>
    %145 = arith.select %143, %144, %141 : vector<8x128xi1>, vector<8x128xf32>
    %146 = tpu.concatenate %138, %131, %145 in 0 : vector<8x128xf32>, vector<8x128xf32>, vector<8x128xf32> -> vector<24x128xf32>
    %c0_41 = arith.constant 0 : index
    %c0_42 = arith.constant 0 : index
    %147 = vector.load %arg2[%c0_41, %c0_42] : memref<16x24xf32, #tpu.memory_space<vmem>>, vector<16x24xf32>
    %cst_43 = arith.constant dense<0.000000e+00> : vector<16x128xf32>
    %148 = tpu.matmul %147, %146, %cst_43 {dimension_numbers = #tpu.dot_dimension_numbers<[1], [0], [0], [1], [0, 0, 1, 1], [], []>} : vector<16x24xf32>, vector<24x128xf32>, vector<16x128xf32> -> vector<16x128xf32>
    %149 = vector.extract_strided_slice %19 {offsets = [0, 5], sizes = [16, 1], strides = [1, 1]} : vector<32x19xf32> to vector<16x1xf32>
    %150 = vector.broadcast %149 : vector<16x1xf32> to vector<16x128xf32>
    %151 = arith.addf %148, %150 : vector<16x128xf32>
    %c2_i32_44 = arith.constant 2 : i32
    %c0_i32_45 = arith.constant 0 : i32
    %152 = arith.cmpi eq, %c2_i32_44, %c0_i32_45 : i32
    %c1_i32_46 = arith.constant 1 : i32
    %153 = arith.select %152, %c1_i32_46, %c2_i32_44 : i32
    %154 = vector.broadcast %153 : i32 to vector<1x128xi32>
    %155 = arith.remsi %18, %154 : vector<1x128xi32>
    %c0_i32_47 = arith.constant 0 : i32
    %156 = vector.broadcast %c0_i32_47 : i32 to vector<1x128xi32>
    %157 = arith.cmpi ne, %155, %156 : vector<1x128xi32>
    %c0_i32_48 = arith.constant 0 : i32
    %158 = vector.broadcast %c0_i32_48 : i32 to vector<1x128xi32>
    %159 = arith.cmpi slt, %155, %158 : vector<1x128xi32>
    %c0_i32_49 = arith.constant 0 : i32
    %160 = arith.cmpi slt, %153, %c0_i32_49 : i32
    %161 = vector.broadcast %160 : i1 to vector<1x128xi1>
    %162 = vector.broadcast %161 : vector<1x128xi1> to vector<1x128xi1>
    %163 = arith.xori %159, %162 : vector<1x128xi1>
    %164 = arith.andi %163, %157 : vector<1x128xi1>
    %165 = vector.broadcast %153 : i32 to vector<1x128xi32>
    %166 = arith.addi %155, %165 : vector<1x128xi32>
    %167 = arith.select %164, %166, %155 : vector<1x128xi1>, vector<1x128xi32>
    %c0_i32_50 = arith.constant 0 : i32
    %168 = vector.broadcast %c0_i32_50 : i32 to vector<1x128xi32>
    %169 = arith.cmpi eq, %167, %168 : vector<1x128xi32>
    %170 = arith.andi %2, %169 : vector<1x128xi1>
    %171 = vector.extract_strided_slice %19 {offsets = [0, 6], sizes = [16, 1], strides = [1, 1]} : vector<32x19xf32> to vector<16x1xf32>
    %172 = vector.extract_strided_slice %19 {offsets = [0, 7], sizes = [16, 1], strides = [1, 1]} : vector<32x19xf32> to vector<16x1xf32>
    %cst_51 = arith.constant 0.000000e+00 : f32
    %173 = vector.shape_cast %170 : vector<1x128xi1> to vector<1x128xi1>
    %174 = vector.broadcast %173 : vector<1x128xi1> to vector<16x128xi1>
    %175 = vector.broadcast %cst_51 : f32 to vector<16x128xf32>
    %176 = arith.select %174, %151, %175 : vector<16x128xi1>, vector<16x128xf32>
    %cst_52 = arith.constant dense<0.000000e+00> : vector<16xf32>
    %177 = vector.multi_reduction <add>, %176, %cst_52 [1] : vector<16x128xf32> to vector<16xf32>
    %178 = vector.shape_cast %177 : vector<16xf32> to vector<16x1xf32>
    %cst_53 = arith.constant 6.250000e-02 : f32
    %179 = vector.broadcast %cst_53 : f32 to vector<16x1xf32>
    %180 = arith.mulf %178, %179 : vector<16x1xf32>
    %181 = vector.broadcast %180 : vector<16x1xf32> to vector<16x128xf32>
    %182 = arith.subf %151, %181 : vector<16x128xf32>
    %cst_54 = arith.constant 0.000000e+00 : f32
    %183 = vector.shape_cast %170 : vector<1x128xi1> to vector<1x128xi1>
    %184 = vector.broadcast %183 : vector<1x128xi1> to vector<16x128xi1>
    %185 = vector.broadcast %cst_54 : f32 to vector<16x128xf32>
    %186 = arith.select %184, %182, %185 : vector<16x128xi1>, vector<16x128xf32>
    %187 = arith.mulf %186, %186 : vector<16x128xf32>
    %cst_55 = arith.constant dense<0.000000e+00> : vector<16xf32>
    %188 = vector.multi_reduction <add>, %187, %cst_55 [1] : vector<16x128xf32> to vector<16xf32>
    %189 = vector.shape_cast %188 : vector<16xf32> to vector<16x1xf32>
    %cst_56 = arith.constant 6.250000e-02 : f32
    %190 = vector.broadcast %cst_56 : f32 to vector<16x1xf32>
    %191 = arith.mulf %189, %190 : vector<16x1xf32>
    %cst_57 = arith.constant 9.99999974E-6 : f32
    %192 = vector.broadcast %cst_57 : f32 to vector<16x1xf32>
    %193 = arith.addf %191, %192 : vector<16x1xf32>
    %194 = math.rsqrt %193 : vector<16x1xf32>
    %195 = vector.broadcast %194 : vector<16x1xf32> to vector<16x128xf32>
    %196 = arith.mulf %182, %195 : vector<16x128xf32>
    %197 = vector.broadcast %171 : vector<16x1xf32> to vector<16x128xf32>
    %198 = arith.mulf %196, %197 : vector<16x128xf32>
    %199 = vector.broadcast %172 : vector<16x1xf32> to vector<16x128xf32>
    %200 = arith.addf %198, %199 : vector<16x128xf32>
    %cst_58 = arith.constant 0.000000e+00 : f32
    %201 = vector.broadcast %cst_58 : f32 to vector<16x128xf32>
    %202 = arith.cmpf ogt, %200, %201 : vector<16x128xf32>
    %cst_59 = arith.constant 0.00999999977 : f32
    %203 = vector.broadcast %cst_59 : f32 to vector<16x128xf32>
    %204 = arith.mulf %203, %200 : vector<16x128xf32>
    %205 = arith.select %202, %200, %204 : vector<16x128xi1>, vector<16x128xf32>
    %c126_i32_60 = arith.constant 126 : i32
    %206 = tpu.dynamic_rotate %205 by %c126_i32_60 dim 1 : vector<16x128xf32>, i32 -> vector<16x128xf32>
    %207 = arith.maximumf %205, %206 : vector<16x128xf32>
    %c4_i32 = arith.constant 4 : i32
    %c0_i32_61 = arith.constant 0 : i32
    %208 = arith.cmpi eq, %c4_i32, %c0_i32_61 : i32
    %c1_i32_62 = arith.constant 1 : i32
    %209 = arith.select %208, %c1_i32_62, %c4_i32 : i32
    %210 = vector.broadcast %209 : i32 to vector<1x128xi32>
    %211 = arith.remsi %18, %210 : vector<1x128xi32>
    %c0_i32_63 = arith.constant 0 : i32
    %212 = vector.broadcast %c0_i32_63 : i32 to vector<1x128xi32>
    %213 = arith.cmpi ne, %211, %212 : vector<1x128xi32>
    %c0_i32_64 = arith.constant 0 : i32
    %214 = vector.broadcast %c0_i32_64 : i32 to vector<1x128xi32>
    %215 = arith.cmpi slt, %211, %214 : vector<1x128xi32>
    %c0_i32_65 = arith.constant 0 : i32
    %216 = arith.cmpi slt, %209, %c0_i32_65 : i32
    %217 = vector.broadcast %216 : i1 to vector<1x128xi1>
    %218 = vector.broadcast %217 : vector<1x128xi1> to vector<1x128xi1>
    %219 = arith.xori %215, %218 : vector<1x128xi1>
    %220 = arith.andi %219, %213 : vector<1x128xi1>
    %221 = vector.broadcast %209 : i32 to vector<1x128xi32>
    %222 = arith.addi %211, %221 : vector<1x128xi32>
    %223 = arith.select %220, %222, %211 : vector<1x128xi1>, vector<1x128xi32>
    %c0_i32_66 = arith.constant 0 : i32
    %224 = vector.broadcast %c0_i32_66 : i32 to vector<1x128xi32>
    %225 = arith.cmpi eq, %223, %224 : vector<1x128xi32>
    %226 = arith.andi %2, %225 : vector<1x128xi1>
    %227 = vector.extract_strided_slice %19 {offsets = [0, 8], sizes = [16, 1], strides = [1, 1]} : vector<32x19xf32> to vector<16x1xf32>
    %228 = vector.extract_strided_slice %19 {offsets = [0, 9], sizes = [16, 1], strides = [1, 1]} : vector<32x19xf32> to vector<16x1xf32>
    %cst_67 = arith.constant 0.000000e+00 : f32
    %229 = vector.shape_cast %226 : vector<1x128xi1> to vector<1x128xi1>
    %230 = vector.broadcast %229 : vector<1x128xi1> to vector<16x128xi1>
    %231 = vector.broadcast %cst_67 : f32 to vector<16x128xf32>
    %232 = arith.select %230, %207, %231 : vector<16x128xi1>, vector<16x128xf32>
    %cst_68 = arith.constant dense<0.000000e+00> : vector<16xf32>
    %233 = vector.multi_reduction <add>, %232, %cst_68 [1] : vector<16x128xf32> to vector<16xf32>
    %234 = vector.shape_cast %233 : vector<16xf32> to vector<16x1xf32>
    %cst_69 = arith.constant 1.250000e-01 : f32
    %235 = vector.broadcast %cst_69 : f32 to vector<16x1xf32>
    %236 = arith.mulf %234, %235 : vector<16x1xf32>
    %237 = vector.broadcast %236 : vector<16x1xf32> to vector<16x128xf32>
    %238 = arith.subf %207, %237 : vector<16x128xf32>
    %cst_70 = arith.constant 0.000000e+00 : f32
    %239 = vector.shape_cast %226 : vector<1x128xi1> to vector<1x128xi1>
    %240 = vector.broadcast %239 : vector<1x128xi1> to vector<16x128xi1>
    %241 = vector.broadcast %cst_70 : f32 to vector<16x128xf32>
    %242 = arith.select %240, %238, %241 : vector<16x128xi1>, vector<16x128xf32>
    %243 = arith.mulf %242, %242 : vector<16x128xf32>
    %cst_71 = arith.constant dense<0.000000e+00> : vector<16xf32>
    %244 = vector.multi_reduction <add>, %243, %cst_71 [1] : vector<16x128xf32> to vector<16xf32>
    %245 = vector.shape_cast %244 : vector<16xf32> to vector<16x1xf32>
    %cst_72 = arith.constant 1.250000e-01 : f32
    %246 = vector.broadcast %cst_72 : f32 to vector<16x1xf32>
    %247 = arith.mulf %245, %246 : vector<16x1xf32>
    %cst_73 = arith.constant 9.99999974E-6 : f32
    %248 = vector.broadcast %cst_73 : f32 to vector<16x1xf32>
    %249 = arith.addf %247, %248 : vector<16x1xf32>
    %250 = math.rsqrt %249 : vector<16x1xf32>
    %251 = vector.broadcast %250 : vector<16x1xf32> to vector<16x128xf32>
    %252 = arith.mulf %238, %251 : vector<16x128xf32>
    %253 = vector.broadcast %227 : vector<16x1xf32> to vector<16x128xf32>
    %254 = arith.mulf %252, %253 : vector<16x128xf32>
    %255 = vector.broadcast %228 : vector<16x1xf32> to vector<16x128xf32>
    %256 = arith.addf %254, %255 : vector<16x128xf32>
    %cst_74 = arith.constant 0.000000e+00 : f32
    %257 = vector.broadcast %cst_74 : f32 to vector<16x128xf32>
    %258 = arith.cmpf ogt, %256, %257 : vector<16x128xf32>
    %cst_75 = arith.constant 0.00999999977 : f32
    %259 = vector.broadcast %cst_75 : f32 to vector<16x128xf32>
    %260 = arith.mulf %259, %256 : vector<16x128xf32>
    %261 = arith.select %258, %256, %260 : vector<16x128xi1>, vector<16x128xf32>
    %c0_i32_76 = arith.constant 0 : i32
    %262 = vector.broadcast %c0_i32_76 : i32 to vector<1x128xi32>
    %263 = arith.cmpi eq, %18, %262 : vector<1x128xi32>
    %c4_i32_77 = arith.constant 4 : i32
    %264 = tpu.dynamic_rotate %261 by %c4_i32_77 dim 1 : vector<16x128xf32>, i32 -> vector<16x128xf32>
    %cst_78 = arith.constant 0.000000e+00 : f32
    %265 = vector.shape_cast %263 : vector<1x128xi1> to vector<1x128xi1>
    %266 = vector.broadcast %265 : vector<1x128xi1> to vector<16x128xi1>
    %267 = vector.broadcast %cst_78 : f32 to vector<16x128xf32>
    %268 = arith.select %266, %267, %264 : vector<16x128xi1>, vector<16x128xf32>
    %c12_i32 = arith.constant 12 : i32
    %269 = vector.broadcast %c12_i32 : i32 to vector<1x128xi32>
    %270 = arith.cmpi eq, %18, %269 : vector<1x128xi32>
    %c124_i32 = arith.constant 124 : i32
    %271 = tpu.dynamic_rotate %261 by %c124_i32 dim 1 : vector<16x128xf32>, i32 -> vector<16x128xf32>
    %cst_79 = arith.constant 0.000000e+00 : f32
    %272 = vector.shape_cast %270 : vector<1x128xi1> to vector<1x128xi1>
    %273 = vector.broadcast %272 : vector<1x128xi1> to vector<16x128xi1>
    %274 = vector.broadcast %cst_79 : f32 to vector<16x128xf32>
    %275 = arith.select %273, %274, %271 : vector<16x128xi1>, vector<16x128xf32>
    %276 = tpu.concatenate %268, %261, %275 in 0 : vector<16x128xf32>, vector<16x128xf32>, vector<16x128xf32> -> vector<48x128xf32>
    %c0_80 = arith.constant 0 : index
    %c0_81 = arith.constant 0 : index
    %277 = vector.load %arg3[%c0_80, %c0_81] : memref<32x48xf32, #tpu.memory_space<vmem>>, vector<32x48xf32>
    %cst_82 = arith.constant dense<0.000000e+00> : vector<32x128xf32>
    %278 = tpu.matmul %277, %276, %cst_82 {dimension_numbers = #tpu.dot_dimension_numbers<[1], [0], [0], [1], [0, 0, 1, 1], [], []>} : vector<32x48xf32>, vector<48x128xf32>, vector<32x128xf32> -> vector<32x128xf32>
    %279 = vector.extract_strided_slice %19 {offsets = [0, 10], sizes = [32, 1], strides = [1, 1]} : vector<32x19xf32> to vector<32x1xf32>
    %280 = vector.broadcast %279 : vector<32x1xf32> to vector<32x128xf32>
    %281 = arith.addf %278, %280 : vector<32x128xf32>
    %c4_i32_83 = arith.constant 4 : i32
    %c0_i32_84 = arith.constant 0 : i32
    %282 = arith.cmpi eq, %c4_i32_83, %c0_i32_84 : i32
    %c1_i32_85 = arith.constant 1 : i32
    %283 = arith.select %282, %c1_i32_85, %c4_i32_83 : i32
    %284 = vector.broadcast %283 : i32 to vector<1x128xi32>
    %285 = arith.remsi %18, %284 : vector<1x128xi32>
    %c0_i32_86 = arith.constant 0 : i32
    %286 = vector.broadcast %c0_i32_86 : i32 to vector<1x128xi32>
    %287 = arith.cmpi ne, %285, %286 : vector<1x128xi32>
    %c0_i32_87 = arith.constant 0 : i32
    %288 = vector.broadcast %c0_i32_87 : i32 to vector<1x128xi32>
    %289 = arith.cmpi slt, %285, %288 : vector<1x128xi32>
    %c0_i32_88 = arith.constant 0 : i32
    %290 = arith.cmpi slt, %283, %c0_i32_88 : i32
    %291 = vector.broadcast %290 : i1 to vector<1x128xi1>
    %292 = vector.broadcast %291 : vector<1x128xi1> to vector<1x128xi1>
    %293 = arith.xori %289, %292 : vector<1x128xi1>
    %294 = arith.andi %293, %287 : vector<1x128xi1>
    %295 = vector.broadcast %283 : i32 to vector<1x128xi32>
    %296 = arith.addi %285, %295 : vector<1x128xi32>
    %297 = arith.select %294, %296, %285 : vector<1x128xi1>, vector<1x128xi32>
    %c0_i32_89 = arith.constant 0 : i32
    %298 = vector.broadcast %c0_i32_89 : i32 to vector<1x128xi32>
    %299 = arith.cmpi eq, %297, %298 : vector<1x128xi32>
    %300 = arith.andi %2, %299 : vector<1x128xi1>
    %301 = vector.extract_strided_slice %19 {offsets = [0, 11], sizes = [32, 1], strides = [1, 1]} : vector<32x19xf32> to vector<32x1xf32>
    %302 = vector.extract_strided_slice %19 {offsets = [0, 12], sizes = [32, 1], strides = [1, 1]} : vector<32x19xf32> to vector<32x1xf32>
    %cst_90 = arith.constant 0.000000e+00 : f32
    %303 = vector.shape_cast %300 : vector<1x128xi1> to vector<1x128xi1>
    %304 = vector.broadcast %303 : vector<1x128xi1> to vector<32x128xi1>
    %305 = vector.broadcast %cst_90 : f32 to vector<32x128xf32>
    %306 = arith.select %304, %281, %305 : vector<32x128xi1>, vector<32x128xf32>
    %cst_91 = arith.constant dense<0.000000e+00> : vector<32xf32>
    %307 = vector.multi_reduction <add>, %306, %cst_91 [1] : vector<32x128xf32> to vector<32xf32>
    %308 = vector.shape_cast %307 : vector<32xf32> to vector<32x1xf32>
    %cst_92 = arith.constant 1.250000e-01 : f32
    %309 = vector.broadcast %cst_92 : f32 to vector<32x1xf32>
    %310 = arith.mulf %308, %309 : vector<32x1xf32>
    %311 = vector.broadcast %310 : vector<32x1xf32> to vector<32x128xf32>
    %312 = arith.subf %281, %311 : vector<32x128xf32>
    %cst_93 = arith.constant 0.000000e+00 : f32
    %313 = vector.shape_cast %300 : vector<1x128xi1> to vector<1x128xi1>
    %314 = vector.broadcast %313 : vector<1x128xi1> to vector<32x128xi1>
    %315 = vector.broadcast %cst_93 : f32 to vector<32x128xf32>
    %316 = arith.select %314, %312, %315 : vector<32x128xi1>, vector<32x128xf32>
    %317 = arith.mulf %316, %316 : vector<32x128xf32>
    %cst_94 = arith.constant dense<0.000000e+00> : vector<32xf32>
    %318 = vector.multi_reduction <add>, %317, %cst_94 [1] : vector<32x128xf32> to vector<32xf32>
    %319 = vector.shape_cast %318 : vector<32xf32> to vector<32x1xf32>
    %cst_95 = arith.constant 1.250000e-01 : f32
    %320 = vector.broadcast %cst_95 : f32 to vector<32x1xf32>
    %321 = arith.mulf %319, %320 : vector<32x1xf32>
    %cst_96 = arith.constant 9.99999974E-6 : f32
    %322 = vector.broadcast %cst_96 : f32 to vector<32x1xf32>
    %323 = arith.addf %321, %322 : vector<32x1xf32>
    %324 = math.rsqrt %323 : vector<32x1xf32>
    %325 = vector.broadcast %324 : vector<32x1xf32> to vector<32x128xf32>
    %326 = arith.mulf %312, %325 : vector<32x128xf32>
    %327 = vector.broadcast %301 : vector<32x1xf32> to vector<32x128xf32>
    %328 = arith.mulf %326, %327 : vector<32x128xf32>
    %329 = vector.broadcast %302 : vector<32x1xf32> to vector<32x128xf32>
    %330 = arith.addf %328, %329 : vector<32x128xf32>
    %cst_97 = arith.constant 0.000000e+00 : f32
    %331 = vector.broadcast %cst_97 : f32 to vector<32x128xf32>
    %332 = arith.cmpf ogt, %330, %331 : vector<32x128xf32>
    %cst_98 = arith.constant 0.00999999977 : f32
    %333 = vector.broadcast %cst_98 : f32 to vector<32x128xf32>
    %334 = arith.mulf %333, %330 : vector<32x128xf32>
    %335 = arith.select %332, %330, %334 : vector<32x128xi1>, vector<32x128xf32>
    %c124_i32_99 = arith.constant 124 : i32
    %336 = tpu.dynamic_rotate %335 by %c124_i32_99 dim 1 : vector<32x128xf32>, i32 -> vector<32x128xf32>
    %337 = arith.maximumf %335, %336 : vector<32x128xf32>
    %c8_i32 = arith.constant 8 : i32
    %c0_i32_100 = arith.constant 0 : i32
    %338 = arith.cmpi eq, %c8_i32, %c0_i32_100 : i32
    %c1_i32_101 = arith.constant 1 : i32
    %339 = arith.select %338, %c1_i32_101, %c8_i32 : i32
    %340 = vector.broadcast %339 : i32 to vector<1x128xi32>
    %341 = arith.remsi %18, %340 : vector<1x128xi32>
    %c0_i32_102 = arith.constant 0 : i32
    %342 = vector.broadcast %c0_i32_102 : i32 to vector<1x128xi32>
    %343 = arith.cmpi ne, %341, %342 : vector<1x128xi32>
    %c0_i32_103 = arith.constant 0 : i32
    %344 = vector.broadcast %c0_i32_103 : i32 to vector<1x128xi32>
    %345 = arith.cmpi slt, %341, %344 : vector<1x128xi32>
    %c0_i32_104 = arith.constant 0 : i32
    %346 = arith.cmpi slt, %339, %c0_i32_104 : i32
    %347 = vector.broadcast %346 : i1 to vector<1x128xi1>
    %348 = vector.broadcast %347 : vector<1x128xi1> to vector<1x128xi1>
    %349 = arith.xori %345, %348 : vector<1x128xi1>
    %350 = arith.andi %349, %343 : vector<1x128xi1>
    %351 = vector.broadcast %339 : i32 to vector<1x128xi32>
    %352 = arith.addi %341, %351 : vector<1x128xi32>
    %353 = arith.select %350, %352, %341 : vector<1x128xi1>, vector<1x128xi32>
    %c0_i32_105 = arith.constant 0 : i32
    %354 = vector.broadcast %c0_i32_105 : i32 to vector<1x128xi32>
    %355 = arith.cmpi eq, %353, %354 : vector<1x128xi32>
    %356 = arith.andi %2, %355 : vector<1x128xi1>
    %357 = vector.extract_strided_slice %19 {offsets = [0, 13], sizes = [32, 1], strides = [1, 1]} : vector<32x19xf32> to vector<32x1xf32>
    %358 = vector.extract_strided_slice %19 {offsets = [0, 14], sizes = [32, 1], strides = [1, 1]} : vector<32x19xf32> to vector<32x1xf32>
    %cst_106 = arith.constant 0.000000e+00 : f32
    %359 = vector.shape_cast %356 : vector<1x128xi1> to vector<1x128xi1>
    %360 = vector.broadcast %359 : vector<1x128xi1> to vector<32x128xi1>
    %361 = vector.broadcast %cst_106 : f32 to vector<32x128xf32>
    %362 = arith.select %360, %337, %361 : vector<32x128xi1>, vector<32x128xf32>
    %cst_107 = arith.constant dense<0.000000e+00> : vector<32xf32>
    %363 = vector.multi_reduction <add>, %362, %cst_107 [1] : vector<32x128xf32> to vector<32xf32>
    %364 = vector.shape_cast %363 : vector<32xf32> to vector<32x1xf32>
    %cst_108 = arith.constant 2.500000e-01 : f32
    %365 = vector.broadcast %cst_108 : f32 to vector<32x1xf32>
    %366 = arith.mulf %364, %365 : vector<32x1xf32>
    %367 = vector.broadcast %366 : vector<32x1xf32> to vector<32x128xf32>
    %368 = arith.subf %337, %367 : vector<32x128xf32>
    %cst_109 = arith.constant 0.000000e+00 : f32
    %369 = vector.shape_cast %356 : vector<1x128xi1> to vector<1x128xi1>
    %370 = vector.broadcast %369 : vector<1x128xi1> to vector<32x128xi1>
    %371 = vector.broadcast %cst_109 : f32 to vector<32x128xf32>
    %372 = arith.select %370, %368, %371 : vector<32x128xi1>, vector<32x128xf32>
    %373 = arith.mulf %372, %372 : vector<32x128xf32>
    %cst_110 = arith.constant dense<0.000000e+00> : vector<32xf32>
    %374 = vector.multi_reduction <add>, %373, %cst_110 [1] : vector<32x128xf32> to vector<32xf32>
    %375 = vector.shape_cast %374 : vector<32xf32> to vector<32x1xf32>
    %cst_111 = arith.constant 2.500000e-01 : f32
    %376 = vector.broadcast %cst_111 : f32 to vector<32x1xf32>
    %377 = arith.mulf %375, %376 : vector<32x1xf32>
    %cst_112 = arith.constant 9.99999974E-6 : f32
    %378 = vector.broadcast %cst_112 : f32 to vector<32x1xf32>
    %379 = arith.addf %377, %378 : vector<32x1xf32>
    %380 = math.rsqrt %379 : vector<32x1xf32>
    %381 = vector.broadcast %380 : vector<32x1xf32> to vector<32x128xf32>
    %382 = arith.mulf %368, %381 : vector<32x128xf32>
    %383 = vector.broadcast %357 : vector<32x1xf32> to vector<32x128xf32>
    %384 = arith.mulf %382, %383 : vector<32x128xf32>
    %385 = vector.broadcast %358 : vector<32x1xf32> to vector<32x128xf32>
    %386 = arith.addf %384, %385 : vector<32x128xf32>
    %cst_113 = arith.constant 0.000000e+00 : f32
    %387 = vector.broadcast %cst_113 : f32 to vector<32x128xf32>
    %388 = arith.cmpf ogt, %386, %387 : vector<32x128xf32>
    %cst_114 = arith.constant 0.00999999977 : f32
    %389 = vector.broadcast %cst_114 : f32 to vector<32x128xf32>
    %390 = arith.mulf %389, %386 : vector<32x128xf32>
    %391 = arith.select %388, %386, %390 : vector<32x128xi1>, vector<32x128xf32>
    %392 = tpu.iota {dimensions = array<i32: 0>} : vector<128x2xi32>
    %393 = tpu.iota {dimensions = array<i32: 1>} : vector<128x2xi32>
    %c16_i32_115 = arith.constant 16 : i32
    %394 = vector.broadcast %c16_i32_115 : i32 to vector<128x2xi32>
    %395 = arith.muli %393, %394 : vector<128x2xi32>
    %c0_i32_116 = arith.constant 0 : i32
    %396 = vector.broadcast %c0_i32_116 : i32 to vector<128x2xi32>
    %397 = arith.addi %395, %396 : vector<128x2xi32>
    %398 = arith.cmpi eq, %392, %397 : vector<128x2xi32>
    %cst_117 = arith.constant 1.000000e+00 : f32
    %cst_118 = arith.constant 0.000000e+00 : f32
    %399 = vector.broadcast %cst_117 : f32 to vector<128x2xf32>
    %400 = vector.broadcast %cst_118 : f32 to vector<128x2xf32>
    %401 = arith.select %398, %399, %400 : vector<128x2xi1>, vector<128x2xf32>
    %cst_119 = arith.constant dense<0.000000e+00> : vector<32x2xf32>
    %402 = tpu.matmul %391, %401, %cst_119 {dimension_numbers = #tpu.dot_dimension_numbers<[1], [0], [0], [1], [0, 0, 1, 1], [], []>} : vector<32x128xf32>, vector<128x2xf32>, vector<32x2xf32> -> vector<32x2xf32>
    %c16_i32_120 = arith.constant 16 : i32
    %403 = vector.broadcast %c16_i32_120 : i32 to vector<128x2xi32>
    %404 = arith.muli %393, %403 : vector<128x2xi32>
    %c8_i32_121 = arith.constant 8 : i32
    %405 = vector.broadcast %c8_i32_121 : i32 to vector<128x2xi32>
    %406 = arith.addi %404, %405 : vector<128x2xi32>
    %407 = arith.cmpi eq, %392, %406 : vector<128x2xi32>
    %cst_122 = arith.constant 1.000000e+00 : f32
    %cst_123 = arith.constant 0.000000e+00 : f32
    %408 = vector.broadcast %cst_122 : f32 to vector<128x2xf32>
    %409 = vector.broadcast %cst_123 : f32 to vector<128x2xf32>
    %410 = arith.select %407, %408, %409 : vector<128x2xi1>, vector<128x2xf32>
    %cst_124 = arith.constant dense<0.000000e+00> : vector<32x2xf32>
    %411 = tpu.matmul %391, %410, %cst_124 {dimension_numbers = #tpu.dot_dimension_numbers<[1], [0], [0], [1], [0, 0, 1, 1], [], []>} : vector<32x128xf32>, vector<128x2xf32>, vector<32x2xf32> -> vector<32x2xf32>
    %412 = tpu.concatenate %402, %411 in 0 : vector<32x2xf32>, vector<32x2xf32> -> vector<64x2xf32>
    %c0_125 = arith.constant 0 : index
    %c0_126 = arith.constant 0 : index
    %413 = vector.load %arg4[%c0_125, %c0_126] : memref<32x64xf32, #tpu.memory_space<vmem>>, vector<32x64xf32>
    %cst_127 = arith.constant dense<0.000000e+00> : vector<32x2xf32>
    %414 = tpu.matmul %413, %412, %cst_127 {dimension_numbers = #tpu.dot_dimension_numbers<[1], [0], [0], [1], [0, 0, 1, 1], [], []>} : vector<32x64xf32>, vector<64x2xf32>, vector<32x2xf32> -> vector<32x2xf32>
    %415 = vector.extract_strided_slice %19 {offsets = [0, 15], sizes = [32, 1], strides = [1, 1]} : vector<32x19xf32> to vector<32x1xf32>
    %416 = vector.broadcast %415 : vector<32x1xf32> to vector<32x2xf32>
    %417 = arith.addf %414, %416 : vector<32x2xf32>
    %418 = vector.extract_strided_slice %19 {offsets = [0, 16], sizes = [32, 1], strides = [1, 1]} : vector<32x19xf32> to vector<32x1xf32>
    %419 = vector.extract_strided_slice %19 {offsets = [0, 17], sizes = [32, 1], strides = [1, 1]} : vector<32x19xf32> to vector<32x1xf32>
    %cst_128 = arith.constant dense<0.000000e+00> : vector<32xf32>
    %420 = vector.multi_reduction <add>, %417, %cst_128 [1] : vector<32x2xf32> to vector<32xf32>
    %421 = vector.shape_cast %420 : vector<32xf32> to vector<32x1xf32>
    %cst_129 = arith.constant 5.000000e-01 : f32
    %422 = vector.broadcast %cst_129 : f32 to vector<32x1xf32>
    %423 = arith.mulf %421, %422 : vector<32x1xf32>
    %424 = vector.broadcast %423 : vector<32x1xf32> to vector<32x2xf32>
    %425 = arith.subf %417, %424 : vector<32x2xf32>
    %426 = arith.mulf %425, %425 : vector<32x2xf32>
    %cst_130 = arith.constant dense<0.000000e+00> : vector<32xf32>
    %427 = vector.multi_reduction <add>, %426, %cst_130 [1] : vector<32x2xf32> to vector<32xf32>
    %428 = vector.shape_cast %427 : vector<32xf32> to vector<32x1xf32>
    %cst_131 = arith.constant 5.000000e-01 : f32
    %429 = vector.broadcast %cst_131 : f32 to vector<32x1xf32>
    %430 = arith.mulf %428, %429 : vector<32x1xf32>
    %cst_132 = arith.constant 9.99999974E-6 : f32
    %431 = vector.broadcast %cst_132 : f32 to vector<32x1xf32>
    %432 = arith.addf %430, %431 : vector<32x1xf32>
    %433 = math.rsqrt %432 : vector<32x1xf32>
    %434 = vector.broadcast %433 : vector<32x1xf32> to vector<32x2xf32>
    %435 = arith.mulf %425, %434 : vector<32x2xf32>
    %436 = vector.broadcast %418 : vector<32x1xf32> to vector<32x2xf32>
    %437 = arith.mulf %435, %436 : vector<32x2xf32>
    %438 = vector.broadcast %419 : vector<32x1xf32> to vector<32x2xf32>
    %439 = arith.addf %437, %438 : vector<32x2xf32>
    %cst_133 = arith.constant 0.000000e+00 : f32
    %440 = vector.broadcast %cst_133 : f32 to vector<32x2xf32>
    %441 = arith.cmpf ogt, %439, %440 : vector<32x2xf32>
    %cst_134 = arith.constant 0.00999999977 : f32
    %442 = vector.broadcast %cst_134 : f32 to vector<32x2xf32>
    %443 = arith.mulf %442, %439 : vector<32x2xf32>
    %444 = arith.select %441, %439, %443 : vector<32x2xi1>, vector<32x2xf32>
    %c0_135 = arith.constant 0 : index
    %c0_136 = arith.constant 0 : index
    %445 = vector.load %arg5[%c0_135, %c0_136] : memref<10x32xf32, #tpu.memory_space<vmem>>, vector<10x32xf32>
    %cst_137 = arith.constant dense<0.000000e+00> : vector<10x2xf32>
    %446 = tpu.matmul %445, %444, %cst_137 {dimension_numbers = #tpu.dot_dimension_numbers<[1], [0], [0], [1], [0, 0, 1, 1], [], []>} : vector<10x32xf32>, vector<32x2xf32>, vector<10x2xf32> -> vector<10x2xf32>
    %447 = vector.extract_strided_slice %19 {offsets = [0, 18], sizes = [10, 1], strides = [1, 1]} : vector<32x19xf32> to vector<10x1xf32>
    %448 = vector.broadcast %447 : vector<10x1xf32> to vector<10x2xf32>
    %449 = arith.addf %446, %448 : vector<10x2xf32>
    %c0_138 = arith.constant 0 : index
    %c0_139 = arith.constant 0 : index
    %450 = vector.load %arg7[%c0_138, %c0_139] : memref<10x2xf32, #tpu.memory_space<vmem>>, vector<10x2xf32>
    tpu.vector_store %arg7[%c0_138, %c0_139], %449 {strides = array<i32>} : memref<10x2xf32, #tpu.memory_space<vmem>>, vector<10x2xf32>,
    return
  }
}

</mosaic_0001>

<llo_original>
// kernel: fcnn_forward_pallas.1
$region0: #{fcnn_forward_pallas.1}
  #allocation0 [shape = 'u32[]', space=smem, size = 0x4, offset = 0x4, fixed_abs, tag = 'smem constant byte address 0x4 - core index']
  #allocation1 [shape = 'u32[144,128]{1,0:T(1,128)}', space=vmem, size = 0x12000, scoped, tag = 'internal scratch']
  %s0 = inlined_call_operand.vmem [shape: f32[8,128], index: 0, kind: input, shape index: {}]
  %s1 = inlined_call_operand.hbm [shape: f32[8,24], index: 1, kind: input, shape index: {}]
  %s2 = inlined_call_operand.vmem [shape: f32[16,24], index: 2, kind: input, shape index: {}]
  %s3 = inlined_call_operand.vmem [shape: f32[32,48], index: 3, kind: input, shape index: {}]
  %s4 = inlined_call_operand.vmem [shape: f32[32,64], index: 4, kind: input, shape index: {}]
  %s5 = inlined_call_operand.hbm [shape: f32[10,32], index: 5, kind: input, shape index: {}]
  %s6 = inlined_call_operand.vmem [shape: f32[32,19], index: 6, kind: input, shape index: {}]
  %s7 = inlined_call_operand.vmem [shape: f32[10,2], index: 7, kind: output, shape index: {}]
  %s8 = sld [smem:[#allocation0]]
  $region46: #{fcnn_forward_pallas.1} parent=0
    _
  %s10 = ssub.s32 1, %s8
  %s11 = scalar_select 0, %s10, %s8
  $region1: #{fcnn_forward_pallas.1} parent=0
    #allocation2 [shape = 'u8[4096]{0}', space=vmem, size = 0x1000, scoped, tag = 'input window, operand 1, single buffered']
    #allocation3 [shape = 's32[1]{0}', space=sflag, size = 0x4, scoped, tag = 'scoped memory for fcnn_forward_pallas.1']
    #allocation4 [shape = 'u8[8192]{0}', space=vmem, size = 0x2000, scoped, tag = 'input window, operand 5, single buffered']
    #allocation5 [shape = 's32[1]{0}', space=sflag, size = 0x4, scoped, tag = 'scoped memory for fcnn_forward_pallas.1']
    %12 = vsyncpa [#allocation3], 0
    %13 = vsyncpa [#allocation5], 0
    // Predicated region
    $region2: #{fcnn_forward_pallas.1} parent=1 // pred_check
      _
    $region3: #{fcnn_forward_pallas.1} parent=1 // pred_check_branch
      %15 = sbr.rel (0) target = $region5
    $region4: #{fcnn_forward_pallas.1} parent=1 // pred_region
      _
    $region5: #{fcnn_forward_pallas.1} parent=1 // pred_fallthru
      _
    // Predicated region
    $region6: #{fcnn_forward_pallas.1} parent=1 // pred_check
      _
    $region7: #{fcnn_forward_pallas.1} parent=1 // pred_check_branch
      %17 = sbr.rel (0) target = $region9
    $region8: #{fcnn_forward_pallas.1} parent=1 // pred_region
      %s19 = ssub.s32 128, 128
      %20 = vsyncadd [#allocation3], %s19
      %s22 = sshll.u32 [#allocation2], 4
      %s23 = int_to_ptr.vmem [resolvable:$true] %s22
      %25 = dma.hbm_to_vmem [thread:$0]  %s1, 128, %s23, [#allocation3]
    $region9: #{fcnn_forward_pallas.1} parent=1 // pred_fallthru
      _
    // Predicated region
    $region10: #{fcnn_forward_pallas.1} parent=1 // pred_check
      _
    $region11: #{fcnn_forward_pallas.1} parent=1 // pred_check_branch
      %27 = sbr.rel (0) target = $region13
    $region12: #{fcnn_forward_pallas.1} parent=1 // pred_region
      _
    $region13: #{fcnn_forward_pallas.1} parent=1 // pred_fallthru
      _
    // Predicated region
    $region14: #{fcnn_forward_pallas.1} parent=1 // pred_check
      _
    $region15: #{fcnn_forward_pallas.1} parent=1 // pred_check_branch
      %29 = sbr.rel (0) target = $region17
    $region16: #{fcnn_forward_pallas.1} parent=1 // pred_region
      _
    $region17: #{fcnn_forward_pallas.1} parent=1 // pred_fallthru
      _
    // Predicated region
    $region18: #{fcnn_forward_pallas.1} parent=1 // pred_check
      _
    $region19: #{fcnn_forward_pallas.1} parent=1 // pred_check_branch
      %31 = sbr.rel (0) target = $region21
    $region20: #{fcnn_forward_pallas.1} parent=1 // pred_region
      _
    $region21: #{fcnn_forward_pallas.1} parent=1 // pred_fallthru
      _
    // Predicated region
    $region22: #{fcnn_forward_pallas.1} parent=1 // pred_check
      _
    $region23: #{fcnn_forward_pallas.1} parent=1 // pred_check_branch
      %33 = sbr.rel (0) target = $region25
    $region24: #{fcnn_forward_pallas.1} parent=1 // pred_region
      %s35 = ssub.s32 256, 256
      %36 = vsyncadd [#allocation5], %s35
      %s37 = sshll.u32 [#allocation4], 4
      %s38 = int_to_ptr.vmem [resolvable:$true] %s37
      %43 = dma.hbm_to_vmem [thread:$0]  %s5, 256, %s38, [#allocation5], 128, 128, 8
    $region25: #{fcnn_forward_pallas.1} parent=1 // pred_fallthru
      _
    // Predicated region
    $region26: #{fcnn_forward_pallas.1} parent=1 // pred_check
      _
    $region27: #{fcnn_forward_pallas.1} parent=1 // pred_check_branch
      %45 = sbr.rel (0) target = $region29
    $region28: #{fcnn_forward_pallas.1} parent=1 // pred_region
      _
    $region29: #{fcnn_forward_pallas.1} parent=1 // pred_fallthru
      _
    // Predicated region
    $region30: #{fcnn_forward_pallas.1} parent=1 // pred_check
      _
    $region31: #{fcnn_forward_pallas.1} parent=1 // pred_check_branch
      %47 = sbr.rel (0) target = $region33
    $region32: #{fcnn_forward_pallas.1} parent=1 // pred_region
      %48 = dma.done [#allocation3], 128
    $region33: #{fcnn_forward_pallas.1} parent=1 // pred_fallthru
      _
    // Predicated region
    $region34: #{fcnn_forward_pallas.1} parent=1 // pred_check
      _
    $region35: #{fcnn_forward_pallas.1} parent=1 // pred_check_branch
      %50 = sbr.rel (0) target = $region37
    $region36: #{fcnn_forward_pallas.1} parent=1 // pred_region
      %51 = dma.done [#allocation5], 256
    $region37: #{fcnn_forward_pallas.1} parent=1 // pred_fallthru
      _
    %v52 = vlaneseq
    %v53 = vand.u32 %v52, 127
    %vm54 = vcmp.lt.s32.totalorder %v53, 32
    %vm55 = vcmp.lt.s32.totalorder %v53, 0
    %v56 = vsub.s32 0, %v53
    %v57 = vsel %vm55, %v56, %v53
    %v58 = vshrl.u32 %v57, 4
    %v59 = vand.u32 %v57, 15
    %v60 = vsub.s32 0, %v59
    %v61 = vsel %vm55, %v60, %v59
    %vm62 = vcmp.ne.s32.totalorder %v61, 0
    %vm63 = vcmp.lt.s32.totalorder %v61, 0
    %vm64 = vmand %vm63, %vm62
    %v65 = vadd.s32 %v61, 16
    %v66 = vsel %vm64, %v65, %v61
    %v67 = vld [vmem:[%s6] sm:$0xff]
    %v68 = vld [vmem:[%s6 + $0x8] sm:$0xff]
    %v69 = vld [vmem:[%s6 + $0x10] sm:$0xff]
    %v70 = vld [vmem:[%s6 + $0x18] sm:$0xff]
    %v71 = vld [vmem:[%s0] sm:$0xff]
    %vm72 = vcmp.eq.s32.totalorder %v66, 0
    %73 = vrot.lane.b32.xlu0 %v71, 1
    %v74 = vpop.permute.xlu0 %73
    %v75 = vsel %vm72, 1, 0
    %vm76 = vcmp.eq.s32.totalorder %v75, 1
    %v77 = vsel %vm76, 0.0, %v74
    %vm78 = vcmp.eq.s32.totalorder %v66, 15
    %79 = vrot.lane.b32.xlu0 %v71, 127
    %v80 = vpop.permute.xlu0 %79
    %v81 = vsel %vm78, 1, 0
    %vm82 = vcmp.eq.s32.totalorder %v81, 1
    %v83 = vsel %vm82, 0.0, %v80
    %v84 = vld [vmem:[#allocation2] sm:$0xff]
    %86 = vset.pattern.permute.xlu0 0
    %87 = vperm.xlu0 %86, %v67
    %v88 = vpop.permute.xlu0 %87
    %vm90 = vcmask 195584
    %v92 = vsel %vm90, %v84, 0
    %94 = vmatprep.subr.mxu0 0.0
    %95 = vmatpush1.msra.mxu0 %v77
    %96 = vmatprep.subr.mxu0 0.0
    %97 = vmatpush1.msra.mxu0 %v71
    %98 = vmatprep.subr.mxu0 0.0
    %99 = vmatpush1.msra.mxu0 %v83
    %100 = vmatprep.subr.mxu0 0.0
    %101 = vmatpush1.msra.mxu0 0.0
    %102 = vmatprep.subr.mxu0 0.0
    %103 = vmatpush1.msra.mxu0 0.0
    %104 = vmatprep.subr.mxu0 0.0
    %105 = vmatpush1.msra.mxu0 0.0
    %106 = vmatprep.subr.mxu0 0.0
    %107 = vmatpush1.msra.mxu0 0.0
    %108 = vmatprep.subr.mxu0 0.0
    %109 = vmatpush1.msra.mxu0 0.0
    %110 = vmatprep.subr.mxu0 0.0
    %111 = vmatpush1.msra.mxu0 0.0
    %112 = vmatprep.subr.mxu0 0.0
    %113 = vmatpush1.msra.mxu0 0.0
    %114 = vmatprep.subr.mxu0 0.0
    %115 = vmatpush1.msra.mxu0 0.0
    %116 = vmatprep.subr.mxu0 0.0
    %117 = vmatpush1.msra.mxu0 0.0
    %118 = vmatprep.subr.mxu0 0.0
    %119 = vmatpush1.msra.mxu0 0.0
    %120 = vmatprep.subr.mxu0 0.0
    %121 = vmatpush1.msra.mxu0 0.0
    %122 = vmatprep.subr.mxu0 0.0
    %123 = vmatpush1.msra.mxu0 0.0
    %124 = vmatprep.subr.mxu0 0.0
    %125 = vmatpush1.msra.mxu0 0.0
    %126 = vmatprep.subr.mxu0 0.0
    %127 = vmatpush1.msra.mxu0 0.0
    %128 = vmatprep.subr.mxu0 0.0
    %129 = vmatpush1.msra.mxu0 0.0
    %130 = vmatprep.subr.mxu0 0.0
    %131 = vmatpush1.msra.mxu0 0.0
    %132 = vmatprep.subr.mxu0 0.0
    %133 = vmatpush1.msra.mxu0 0.0
    %134 = vmatprep.subr.mxu0 0.0
    %135 = vmatpush1.msra.mxu0 0.0
    %136 = vmatprep.subr.mxu0 0.0
    %137 = vmatpush1.msra.mxu0 0.0
    %138 = vmatprep.subr.mxu0 0.0
    %139 = vmatpush1.msra.mxu0 0.0
    %140 = vmatprep.subr.mxu0 0.0
    %141 = vmatpush1.msra.mxu0 0.0
    %142 = vmatprep.subr.mxu0 0.0
    %143 = vmatpush1.msra.mxu0 0.0
    %144 = vmatprep.subr.mxu0 0.0
    %145 = vmatpush1.msra.mxu0 0.0
    %146 = vmatprep.subr.mxu0 0.0
    %147 = vmatpush1.msra.mxu0 0.0
    %148 = vmatprep.subr.mxu0 0.0
    %149 = vmatpush1.msra.mxu0 0.0
    %150 = vmatprep.subr.mxu0 0.0
    %151 = vmatpush1.msra.mxu0 0.0
    %152 = vmatprep.subr.mxu0 0.0
    %153 = vmatpush1.msra.mxu0 0.0
    %154 = vmatprep.subr.mxu0 0.0
    %155 = vmatpush1.msra.mxu0 0.0
    %156 = vmatprep.subr.mxu0 0.0
    %157 = vmatpush1.msra.mxu0 0.0
    %158 = vmatprep.mubr.f32.mxu0 0.0
    %159 = vmatmul.mubr.f32.gmra.mrb[0].mxu0 %v92
    %v160 = vpop.f32.mrb[0].mxu0
    %v161 = vadd.f32 %v88, %v160
    %v162 = vpop.f32.mrb[0].mxu0
    %163 = vdwg.mxu0
    %v164 = vsel %vm54, 1, 0
    %vm165 = vcmp.eq.s32.totalorder %v164, 1
    %v166 = vsel %vm165, %v161, 0.0
    %167 = vadd.xlane.f32.xlu0 %v166
    %v168 = vpop.xlane.xlu0 %167
    %v169 = vmul.f32 %v168, 0.03125
    %v170 = vsub.f32 %v161, %v169
    %v171 = vsel %vm165, %v170, 0.0
    %v172 = vmul.f32 %v171, %v171
    %173 = vadd.xlane.f32.xlu0 %v172
    %v174 = vpop.xlane.xlu0 %173
    %v175 = vmul.f32 %v174, 0.03125
    %v176 = vadd.f32 %v175, 1e-05
    %v177 = vrsqrt.pop %v176
    %v178 = vmul.f32 %v170, %v177
    %179 = vset.pattern.permute.xlu0 1
    %180 = vperm.xlu0 %179, %v67
    %v181 = vpop.permute.xlu0 %180
    %v183 = vmul.f32 %v178, %v181
    %184 = vset.pattern.permute.xlu0 2
    %185 = vperm.xlu0 %184, %v67
    %v186 = vpop.permute.xlu0 %185
    %v188 = vadd.f32 %v183, %v186
    %vm189 = vcmp.gt.f32.partialorder %v188, 0.0
    %v190 = vmul.f32 %v188, 0.01
    %v191 = vsel %vm189, %v188, %v190
    %192 = vrot.lane.b32.xlu0 %v191, 127
    %v193 = vpop.permute.xlu0 %192
    %v194 = vmax.f32 %v191, %v193
    %vm195 = vcmp.lt.s32.totalorder %v66, 0
    %v196 = vsub.s32 0, %v66
    %v197 = vsel %vm195, %v196, %v66
    %v198 = vshrl.u32 %v197, 1
    %v199 = vand.u32 %v197, 1
    %v200 = vsub.s32 0, %v199
    %v201 = vsel %vm195, %v200, %v199
    %vm202 = vcmp.ne.s32.totalorder %v201, 0
    %vm203 = vcmp.lt.s32.totalorder %v201, 0
    %vm204 = vmand %vm203, %vm202
    %v205 = vadd.s32 %v201, 2
    %v206 = vsel %vm204, %v205, %v201
    %vm207 = vcmp.eq.s32.totalorder %v206, 0
    %vm208 = vmand %vm54, %vm207
    %v209 = vsel %vm208, 1, 0
    %vm210 = vcmp.eq.s32.totalorder %v209, 1
    %v211 = vsel %vm210, %v194, 0.0
    %212 = vadd.xlane.f32.xlu0 %v211
    %v213 = vpop.xlane.xlu0 %212
    %v214 = vmul.f32 %v213, 0.0625
    %v215 = vsub.f32 %v194, %v214
    %v216 = vsel %vm210, %v215, 0.0
    %v217 = vmul.f32 %v216, %v216
    %218 = vadd.xlane.f32.xlu0 %v217
    %v219 = vpop.xlane.xlu0 %218
    %v220 = vmul.f32 %v219, 0.0625
    %v221 = vadd.f32 %v220, 1e-05
    %v222 = vrsqrt.pop %v221
    %v223 = vmul.f32 %v215, %v222
    %224 = vset.pattern.permute.xlu0 3
    %225 = vperm.xlu0 %224, %v67
    %v226 = vpop.permute.xlu0 %225
    %v228 = vmul.f32 %v223, %v226
    %229 = vset.pattern.permute.xlu0 4
    %230 = vperm.xlu0 %229, %v67
    %v231 = vpop.permute.xlu0 %230
    %v233 = vadd.f32 %v228, %v231
    %vm234 = vcmp.gt.f32.partialorder %v233, 0.0
    %v235 = vmul.f32 %v233, 0.01
    %v236 = vsel %vm234, %v233, %v235
    %237 = vrot.lane.b32.xlu0 %v236, 2
    %v238 = vpop.permute.xlu0 %237
    %v239 = vsel %vm76, 0.0, %v238
    %vm240 = vcmp.eq.s32.totalorder %v66, 14
    %241 = vrot.lane.b32.xlu0 %v236, 126
    %v242 = vpop.permute.xlu0 %241
    %v243 = vsel %vm240, 1, 0
    %vm244 = vcmp.eq.s32.totalorder %v243, 1
    %v245 = vsel %vm244, 0.0, %v242
    %v246 = vld [vmem:[%s2] sm:$0xff]
    %v247 = vld [vmem:[%s2 + $0x8] sm:$0xff]
    %248 = vset.pattern.permute.xlu0 5
    %249 = vperm.xlu0 %248, %v67
    %v250 = vpop.permute.xlu0 %249
    %253 = vset.pattern.permute.xlu0 5
    %254 = vperm.xlu0 %253, %v68
    %v255 = vpop.permute.xlu0 %254
    %v258 = vsel %vm90, %v246, 0
    %v261 = vsel %vm90, %v247, 0
    %263 = vmatprep.subr.mxu0 0.0
    %264 = vmatpush1.msra.mxu0 %v239
    %265 = vmatprep.subr.mxu0 0.0
    %266 = vmatpush1.msra.mxu0 %v236
    %267 = vmatprep.subr.mxu0 0.0
    %268 = vmatpush1.msra.mxu0 %v245
    %269 = vmatprep.subr.mxu0 0.0
    %270 = vmatpush1.msra.mxu0 0.0
    %271 = vmatprep.subr.mxu0 0.0
    %272 = vmatpush1.msra.mxu0 0.0
    %273 = vmatprep.subr.mxu0 0.0
    %274 = vmatpush1.msra.mxu0 0.0
    %275 = vmatprep.subr.mxu0 0.0
    %276 = vmatpush1.msra.mxu0 0.0
    %277 = vmatprep.subr.mxu0 0.0
    %278 = vmatpush1.msra.mxu0 0.0
    %279 = vmatprep.subr.mxu0 0.0
    %280 = vmatpush1.msra.mxu0 0.0
    %281 = vmatprep.subr.mxu0 0.0
    %282 = vmatpush1.msra.mxu0 0.0
    %283 = vmatprep.subr.mxu0 0.0
    %284 = vmatpush1.msra.mxu0 0.0
    %285 = vmatprep.subr.mxu0 0.0
    %286 = vmatpush1.msra.mxu0 0.0
    %287 = vmatprep.subr.mxu0 0.0
    %288 = vmatpush1.msra.mxu0 0.0
    %289 = vmatprep.subr.mxu0 0.0
    %290 = vmatpush1.msra.mxu0 0.0
    %291 = vmatprep.subr.mxu0 0.0
    %292 = vmatpush1.msra.mxu0 0.0
    %293 = vmatprep.subr.mxu0 0.0
    %294 = vmatpush1.msra.mxu0 0.0
    %295 = vmatprep.subr.mxu0 0.0
    %296 = vmatpush1.msra.mxu0 0.0
    %297 = vmatprep.subr.mxu0 0.0
    %298 = vmatpush1.msra.mxu0 0.0
    %299 = vmatprep.subr.mxu0 0.0
    %300 = vmatpush1.msra.mxu0 0.0
    %301 = vmatprep.subr.mxu0 0.0
    %302 = vmatpush1.msra.mxu0 0.0
    %303 = vmatprep.subr.mxu0 0.0
    %304 = vmatpush1.msra.mxu0 0.0
    %305 = vmatprep.subr.mxu0 0.0
    %306 = vmatpush1.msra.mxu0 0.0
    %307 = vmatprep.subr.mxu0 0.0
    %308 = vmatpush1.msra.mxu0 0.0
    %309 = vmatprep.subr.mxu0 0.0
    %310 = vmatpush1.msra.mxu0 0.0
    %311 = vmatprep.subr.mxu0 0.0
    %312 = vmatpush1.msra.mxu0 0.0
    %313 = vmatprep.subr.mxu0 0.0
    %314 = vmatpush1.msra.mxu0 0.0
    %315 = vmatprep.subr.mxu0 0.0
    %316 = vmatpush1.msra.mxu0 0.0
    %317 = vmatprep.subr.mxu0 0.0
    %318 = vmatpush1.msra.mxu0 0.0
    %319 = vmatprep.subr.mxu0 0.0
    %320 = vmatpush1.msra.mxu0 0.0
    %321 = vmatprep.subr.mxu0 0.0
    %322 = vmatpush1.msra.mxu0 0.0
    %323 = vmatprep.subr.mxu0 0.0
    %324 = vmatpush1.msra.mxu0 0.0
    %325 = vmatprep.subr.mxu0 0.0
    %326 = vmatpush1.msra.mxu0 0.0
    %327 = vmatprep.mubr.f32.mxu0 0.0
    %328 = vmatmul.mubr.f32.gmra.mrb[0].mxu0 %v258
    %v329 = vpop.f32.mrb[0].mxu0
    %v330 = vadd.f32 %v250, %v329
    %v331 = vpop.f32.mrb[0].mxu0
    %332 = vmatprep.mubr.f32.mxu0 0.0
    %333 = vmatmul.mubr.f32.gmra.mrb[0].mxu0 %v261
    %v334 = vpop.f32.mrb[0].mxu0
    %v335 = vadd.f32 %v255, %v334
    %v336 = vpop.f32.mrb[0].mxu0
    %337 = vdwg.mxu0
    %v338 = vsel %vm210, %v330, 0.0
    %v339 = vsel %vm210, %v335, 0.0
    %340 = vadd.xlane.f32.xlu0 %v338
    %v341 = vpop.xlane.xlu0 %340
    %342 = vadd.xlane.f32.xlu0 %v339
    %v343 = vpop.xlane.xlu0 %342
    %v344 = vmul.f32 %v341, 0.0625
    %v345 = vmul.f32 %v343, 0.0625
    %v346 = vsub.f32 %v330, %v344
    %v347 = vsub.f32 %v335, %v345
    %v348 = vsel %vm210, %v346, 0.0
    %v349 = vsel %vm210, %v347, 0.0
    %v350 = vmul.f32 %v348, %v348
    %v351 = vmul.f32 %v349, %v349
    %352 = vadd.xlane.f32.xlu0 %v350
    %v353 = vpop.xlane.xlu0 %352
    %354 = vadd.xlane.f32.xlu0 %v351
    %v355 = vpop.xlane.xlu0 %354
    %v356 = vmul.f32 %v353, 0.0625
    %v357 = vmul.f32 %v355, 0.0625
    %v358 = vadd.f32 %v356, 1e-05
    %v359 = vadd.f32 %v357, 1e-05
    %v360 = vrsqrt.pop %v358
    %v361 = vrsqrt.pop %v359
    %v362 = vmul.f32 %v346, %v360
    %v363 = vmul.f32 %v347, %v361
    %364 = vset.pattern.permute.xlu0 6
    %365 = vperm.xlu0 %364, %v67
    %v366 = vpop.permute.xlu0 %365
    %368 = vset.pattern.permute.xlu0 6
    %369 = vperm.xlu0 %368, %v68
    %v370 = vpop.permute.xlu0 %369
    %v372 = vmul.f32 %v362, %v366
    %v373 = vmul.f32 %v363, %v370
    %374 = vset.pattern.permute.xlu0 7
    %375 = vperm.xlu0 %374, %v67
    %v376 = vpop.permute.xlu0 %375
    %378 = vset.pattern.permute.xlu0 7
    %379 = vperm.xlu0 %378, %v68
    %v380 = vpop.permute.xlu0 %379
    %v382 = vadd.f32 %v372, %v376
    %v383 = vadd.f32 %v373, %v380
    %vm384 = vcmp.gt.f32.partialorder %v382, 0.0
    %vm385 = vcmp.gt.f32.partialorder %v383, 0.0
    %v386 = vmul.f32 %v382, 0.01
    %v387 = vmul.f32 %v383, 0.01
    %v388 = vsel %vm384, %v382, %v386
    %v389 = vsel %vm385, %v383, %v387
    %390 = vrot.lane.b32.xlu0 %v388, 126
    %v391 = vpop.permute.xlu0 %390
    %392 = vrot.lane.b32.xlu0 %v389, 126
    %v393 = vpop.permute.xlu0 %392
    %v394 = vmax.f32 %v388, %v391
    %v395 = vmax.f32 %v389, %v393
    %vm396 = vcmp.lt.s32.totalorder %v66, 0
    %v397 = vsub.s32 0, %v66
    %v398 = vsel %vm396, %v397, %v66
    %v399 = vshrl.u32 %v398, 2
    %v400 = vand.u32 %v398, 3
    %v401 = vsub.s32 0, %v400
    %v402 = vsel %vm396, %v401, %v400
    %vm403 = vcmp.ne.s32.totalorder %v402, 0
    %vm404 = vcmp.lt.s32.totalorder %v402, 0
    %vm405 = vmand %vm404, %vm403
    %v406 = vadd.s32 %v402, 4
    %v407 = vsel %vm405, %v406, %v402
    %vm408 = vcmp.eq.s32.totalorder %v407, 0
    %vm409 = vmand %vm54, %vm408
    %v410 = vsel %vm409, 1, 0
    %vm411 = vcmp.eq.s32.totalorder %v410, 1
    %v412 = vsel %vm411, %v394, 0.0
    %v413 = vsel %vm411, %v395, 0.0
    %414 = vadd.xlane.f32.xlu0 %v412
    %v415 = vpop.xlane.xlu0 %414
    %416 = vadd.xlane.f32.xlu0 %v413
    %v417 = vpop.xlane.xlu0 %416
    %v418 = vmul.f32 %v415, 0.125
    %v419 = vmul.f32 %v417, 0.125
    %v420 = vsub.f32 %v394, %v418
    %v421 = vsub.f32 %v395, %v419
    %v422 = vsel %vm411, %v420, 0.0
    %v423 = vsel %vm411, %v421, 0.0
    %v424 = vmul.f32 %v422, %v422
    %v425 = vmul.f32 %v423, %v423
    %426 = vadd.xlane.f32.xlu0 %v424
    %v427 = vpop.xlane.xlu0 %426
    %428 = vadd.xlane.f32.xlu0 %v425
    %v429 = vpop.xlane.xlu0 %428
    %v430 = vmul.f32 %v427, 0.125
    %v431 = vmul.f32 %v429, 0.125
    %v432 = vadd.f32 %v430, 1e-05
    %v433 = vadd.f32 %v431, 1e-05
    %v434 = vrsqrt.pop %v432
    %v435 = vrsqrt.pop %v433
    %v436 = vmul.f32 %v420, %v434
    %v437 = vmul.f32 %v421, %v435
    %438 = vset.pattern.permute.xlu0 8
    %439 = vperm.xlu0 %438, %v67
    %v440 = vpop.permute.xlu0 %439
    %442 = vset.pattern.permute.xlu0 8
    %443 = vperm.xlu0 %442, %v68
    %v444 = vpop.permute.xlu0 %443
    %v446 = vmul.f32 %v436, %v440
    %v447 = vmul.f32 %v437, %v444
    %448 = vset.pattern.permute.xlu0 9
    %449 = vperm.xlu0 %448, %v67
    %v450 = vpop.permute.xlu0 %449
    %452 = vset.pattern.permute.xlu0 9
    %453 = vperm.xlu0 %452, %v68
    %v454 = vpop.permute.xlu0 %453
    %v456 = vadd.f32 %v446, %v450
    %v457 = vadd.f32 %v447, %v454
    %vm458 = vcmp.gt.f32.partialorder %v456, 0.0
    %vm459 = vcmp.gt.f32.partialorder %v457, 0.0
    %v460 = vmul.f32 %v456, 0.01
    %v461 = vmul.f32 %v457, 0.01
    %v462 = vsel %vm458, %v456, %v460
    %v463 = vsel %vm459, %v457, %v461
    %464 = vrot.lane.b32.xlu0 %v462, 4
    %v465 = vpop.permute.xlu0 %464
    %466 = vrot.lane.b32.xlu0 %v463, 4
    %v467 = vpop.permute.xlu0 %466
    %v468 = vsel %vm76, 0.0, %v465
    %v469 = vsel %vm76, 0.0, %v467
    %vm470 = vcmp.eq.s32.totalorder %v66, 12
    %471 = vrot.lane.b32.xlu0 %v462, 124
    %v472 = vpop.permute.xlu0 %471
    %473 = vrot.lane.b32.xlu0 %v463, 124
    %v474 = vpop.permute.xlu0 %473
    %v475 = vsel %vm470, 1, 0
    %vm476 = vcmp.eq.s32.totalorder %v475, 1
    %v477 = vsel %vm476, 0.0, %v472
    %v478 = vsel %vm476, 0.0, %v474
    %v479 = vld [vmem:[%s3] sm:$0xff]
    %v480 = vld [vmem:[%s3 + $0x8] sm:$0xff]
    %v481 = vld [vmem:[%s3 + $0x10] sm:$0xff]
    %v482 = vld [vmem:[%s3 + $0x18] sm:$0xff]
    %483 = vset.pattern.permute.xlu0 10
    %484 = vperm.xlu0 %483, %v67
    %v485 = vpop.permute.xlu0 %484
    %487 = vset.pattern.permute.xlu0 10
    %488 = vperm.xlu0 %487, %v68
    %v489 = vpop.permute.xlu0 %488
    %492 = vset.pattern.permute.xlu0 10
    %493 = vperm.xlu0 %492, %v69
    %v494 = vpop.permute.xlu0 %493
    %497 = vset.pattern.permute.xlu0 10
    %498 = vperm.xlu0 %497, %v70
    %v499 = vpop.permute.xlu0 %498
    %vm501 = vcmask 392192
    %v503 = vsel %vm501, %v479, 0
    %v506 = vsel %vm501, %v480, 0
    %v509 = vsel %vm501, %v481, 0
    %v512 = vsel %vm501, %v482, 0
    %514 = vmatprep.subr.mxu0 0.0
    %515 = vmatpush1.msra.mxu0 %v468
    %516 = vmatprep.subr.mxu0 0.0
    %517 = vmatpush1.msra.mxu0 %v469
    %518 = vmatprep.subr.mxu0 0.0
    %519 = vmatpush1.msra.mxu0 %v462
    %520 = vmatprep.subr.mxu0 0.0
    %521 = vmatpush1.msra.mxu0 %v463
    %522 = vmatprep.subr.mxu0 0.0
    %523 = vmatpush1.msra.mxu0 %v477
    %524 = vmatprep.subr.mxu0 0.0
    %525 = vmatpush1.msra.mxu0 %v478
    %526 = vmatprep.subr.mxu0 0.0
    %527 = vmatpush1.msra.mxu0 0.0
    %528 = vmatprep.subr.mxu0 0.0
    %529 = vmatpush1.msra.mxu0 0.0
    %530 = vmatprep.subr.mxu0 0.0
    %531 = vmatpush1.msra.mxu0 0.0
    %532 = vmatprep.subr.mxu0 0.0
    %533 = vmatpush1.msra.mxu0 0.0
    %534 = vmatprep.subr.mxu0 0.0
    %535 = vmatpush1.msra.mxu0 0.0
    %536 = vmatprep.subr.mxu0 0.0
    %537 = vmatpush1.msra.mxu0 0.0
    %538 = vmatprep.subr.mxu0 0.0
    %539 = vmatpush1.msra.mxu0 0.0
    %540 = vmatprep.subr.mxu0 0.0
    %541 = vmatpush1.msra.mxu0 0.0
    %542 = vmatprep.subr.mxu0 0.0
    %543 = vmatpush1.msra.mxu0 0.0
    %544 = vmatprep.subr.mxu0 0.0
    %545 = vmatpush1.msra.mxu0 0.0
    %546 = vmatprep.subr.mxu0 0.0
    %547 = vmatpush1.msra.mxu0 0.0
    %548 = vmatprep.subr.mxu0 0.0
    %549 = vmatpush1.msra.mxu0 0.0
    %550 = vmatprep.subr.mxu0 0.0
    %551 = vmatpush1.msra.mxu0 0.0
    %552 = vmatprep.subr.mxu0 0.0
    %553 = vmatpush1.msra.mxu0 0.0
    %554 = vmatprep.subr.mxu0 0.0
    %555 = vmatpush1.msra.mxu0 0.0
    %556 = vmatprep.subr.mxu0 0.0
    %557 = vmatpush1.msra.mxu0 0.0
    %558 = vmatprep.subr.mxu0 0.0
    %559 = vmatpush1.msra.mxu0 0.0
    %560 = vmatprep.subr.mxu0 0.0
    %561 = vmatpush1.msra.mxu0 0.0
    %562 = vmatprep.subr.mxu0 0.0
    %563 = vmatpush1.msra.mxu0 0.0
    %564 = vmatprep.subr.mxu0 0.0
    %565 = vmatpush1.msra.mxu0 0.0
    %566 = vmatprep.subr.mxu0 0.0
    %567 = vmatpush1.msra.mxu0 0.0
    %568 = vmatprep.subr.mxu0 0.0
    %569 = vmatpush1.msra.mxu0 0.0
    %570 = vmatprep.subr.mxu0 0.0
    %571 = vmatpush1.msra.mxu0 0.0
    %572 = vmatprep.subr.mxu0 0.0
    %573 = vmatpush1.msra.mxu0 0.0
    %574 = vmatprep.subr.mxu0 0.0
    %575 = vmatpush1.msra.mxu0 0.0
    %576 = vmatprep.subr.mxu0 0.0
    %577 = vmatpush1.msra.mxu0 0.0
    %578 = vmatprep.mubr.f32.mxu0 0.0
    %579 = vmatmul.mubr.f32.gmra.mrb[0].mxu0 %v503
    %v580 = vpop.f32.mrb[0].mxu0
    %v581 = vadd.f32 %v485, %v580
    %v582 = vpop.f32.mrb[0].mxu0
    %583 = vmatprep.mubr.f32.mxu0 0.0
    %584 = vmatmul.mubr.f32.gmra.mrb[0].mxu0 %v506
    %v585 = vpop.f32.mrb[0].mxu0
    %v586 = vadd.f32 %v489, %v585
    %v587 = vpop.f32.mrb[0].mxu0
    %588 = vmatprep.mubr.f32.mxu0 0.0
    %589 = vmatmul.mubr.f32.gmra.mrb[0].mxu0 %v509
    %v590 = vpop.f32.mrb[0].mxu0
    %v591 = vadd.f32 %v494, %v590
    %v592 = vpop.f32.mrb[0].mxu0
    %593 = vmatprep.mubr.f32.mxu0 0.0
    %594 = vmatmul.mubr.f32.gmra.mrb[0].mxu0 %v512
    %v595 = vpop.f32.mrb[0].mxu0
    %v596 = vadd.f32 %v499, %v595
    %v597 = vpop.f32.mrb[0].mxu0
    %598 = vdwg.mxu0
    %v599 = vsel %vm411, %v581, 0.0
    %v600 = vsel %vm411, %v586, 0.0
    %v601 = vsel %vm411, %v591, 0.0
    %v602 = vsel %vm411, %v596, 0.0
    %603 = vadd.xlane.f32.xlu0 %v599
    %v604 = vpop.xlane.xlu0 %603
    %605 = vadd.xlane.f32.xlu0 %v600
    %v606 = vpop.xlane.xlu0 %605
    %607 = vadd.xlane.f32.xlu0 %v601
    %v608 = vpop.xlane.xlu0 %607
    %609 = vadd.xlane.f32.xlu0 %v602
    %v610 = vpop.xlane.xlu0 %609
    %v611 = vmul.f32 %v604, 0.125
    %v612 = vmul.f32 %v606, 0.125
    %v613 = vmul.f32 %v608, 0.125
    %v614 = vmul.f32 %v610, 0.125
    %v615 = vsub.f32 %v581, %v611
    %v616 = vsub.f32 %v586, %v612
    %v617 = vsub.f32 %v591, %v613
    %v618 = vsub.f32 %v596, %v614
    %v619 = vsel %vm411, %v615, 0.0
    %v620 = vsel %vm411, %v616, 0.0
    %v621 = vsel %vm411, %v617, 0.0
    %v622 = vsel %vm411, %v618, 0.0
    %v623 = vmul.f32 %v619, %v619
    %v624 = vmul.f32 %v620, %v620
    %v625 = vmul.f32 %v621, %v621
    %v626 = vmul.f32 %v622, %v622
    %627 = vadd.xlane.f32.xlu0 %v623
    %v628 = vpop.xlane.xlu0 %627
    %629 = vadd.xlane.f32.xlu0 %v624
    %v630 = vpop.xlane.xlu0 %629
    %631 = vadd.xlane.f32.xlu0 %v625
    %v632 = vpop.xlane.xlu0 %631
    %633 = vadd.xlane.f32.xlu0 %v626
    %v634 = vpop.xlane.xlu0 %633
    %v635 = vmul.f32 %v628, 0.125
    %v636 = vmul.f32 %v630, 0.125
    %v637 = vmul.f32 %v632, 0.125
    %v638 = vmul.f32 %v634, 0.125
    %v639 = vadd.f32 %v635, 1e-05
    %v640 = vadd.f32 %v636, 1e-05
    %v641 = vadd.f32 %v637, 1e-05
    %v642 = vadd.f32 %v638, 1e-05
    %v643 = vrsqrt.pop %v639
    %v644 = vrsqrt.pop %v640
    %v645 = vrsqrt.pop %v641
    %v646 = vrsqrt.pop %v642
    %v647 = vmul.f32 %v615, %v643
    %v648 = vmul.f32 %v616, %v644
    %v649 = vmul.f32 %v617, %v645
    %v650 = vmul.f32 %v618, %v646
    %651 = vset.pattern.permute.xlu0 11
    %652 = vperm.xlu0 %651, %v67
    %v653 = vpop.permute.xlu0 %652
    %655 = vset.pattern.permute.xlu0 11
    %656 = vperm.xlu0 %655, %v68
    %v657 = vpop.permute.xlu0 %656
    %659 = vset.pattern.permute.xlu0 11
    %660 = vperm.xlu0 %659, %v69
    %v661 = vpop.permute.xlu0 %660
    %663 = vset.pattern.permute.xlu0 11
    %664 = vperm.xlu0 %663, %v70
    %v665 = vpop.permute.xlu0 %664
    %v667 = vmul.f32 %v647, %v653
    %v668 = vmul.f32 %v648, %v657
    %v669 = vmul.f32 %v649, %v661
    %v670 = vmul.f32 %v650, %v665
    %671 = vset.pattern.permute.xlu0 12
    %672 = vperm.xlu0 %671, %v67
    %v673 = vpop.permute.xlu0 %672
    %675 = vset.pattern.permute.xlu0 12
    %676 = vperm.xlu0 %675, %v68
    %v677 = vpop.permute.xlu0 %676
    %679 = vset.pattern.permute.xlu0 12
    %680 = vperm.xlu0 %679, %v69
    %v681 = vpop.permute.xlu0 %680
    %683 = vset.pattern.permute.xlu0 12
    %684 = vperm.xlu0 %683, %v70
    %v685 = vpop.permute.xlu0 %684
    %v687 = vadd.f32 %v667, %v673
    %v688 = vadd.f32 %v668, %v677
    %v689 = vadd.f32 %v669, %v681
    %v690 = vadd.f32 %v670, %v685
    %vm691 = vcmp.gt.f32.partialorder %v687, 0.0
    %vm692 = vcmp.gt.f32.partialorder %v688, 0.0
    %vm693 = vcmp.gt.f32.partialorder %v689, 0.0
    %vm694 = vcmp.gt.f32.partialorder %v690, 0.0
    %v695 = vmul.f32 %v687, 0.01
    %v696 = vmul.f32 %v688, 0.01
    %v697 = vmul.f32 %v689, 0.01
    %v698 = vmul.f32 %v690, 0.01
    %v699 = vsel %vm691, %v687, %v695
    %v700 = vsel %vm692, %v688, %v696
    %v701 = vsel %vm693, %v689, %v697
    %v702 = vsel %vm694, %v690, %v698
    %703 = vrot.lane.b32.xlu0 %v699, 124
    %v704 = vpop.permute.xlu0 %703
    %705 = vrot.lane.b32.xlu0 %v700, 124
    %v706 = vpop.permute.xlu0 %705
    %707 = vrot.lane.b32.xlu0 %v701, 124
    %v708 = vpop.permute.xlu0 %707
    %709 = vrot.lane.b32.xlu0 %v702, 124
    %v710 = vpop.permute.xlu0 %709
    %v711 = vmax.f32 %v699, %v704
    %v712 = vmax.f32 %v700, %v706
    %v713 = vmax.f32 %v701, %v708
    %v714 = vmax.f32 %v702, %v710
    %vm715 = vcmp.lt.s32.totalorder %v66, 0
    %v716 = vsub.s32 0, %v66
    %v717 = vsel %vm715, %v716, %v66
    %v718 = vshrl.u32 %v717, 3
    %v719 = vand.u32 %v717, 7
    %v720 = vsub.s32 0, %v719
    %v721 = vsel %vm715, %v720, %v719
    %vm722 = vcmp.ne.s32.totalorder %v721, 0
    %vm723 = vcmp.lt.s32.totalorder %v721, 0
    %vm724 = vmand %vm723, %vm722
    %v725 = vadd.s32 %v721, 8
    %v726 = vsel %vm724, %v725, %v721
    %vm727 = vcmp.eq.s32.totalorder %v726, 0
    %vm728 = vmand %vm54, %vm727
    %v729 = vsel %vm728, 1, 0
    %vm730 = vcmp.eq.s32.totalorder %v729, 1
    %v731 = vsel %vm730, %v711, 0.0
    %v732 = vsel %vm730, %v712, 0.0
    %v733 = vsel %vm730, %v713, 0.0
    %v734 = vsel %vm730, %v714, 0.0
    %735 = vadd.xlane.f32.xlu0 %v731
    %v736 = vpop.xlane.xlu0 %735
    %737 = vadd.xlane.f32.xlu0 %v732
    %v738 = vpop.xlane.xlu0 %737
    %739 = vadd.xlane.f32.xlu0 %v733
    %v740 = vpop.xlane.xlu0 %739
    %741 = vadd.xlane.f32.xlu0 %v734
    %v742 = vpop.xlane.xlu0 %741
    %v743 = vmul.f32 %v736, 0.25
    %v744 = vmul.f32 %v738, 0.25
    %v745 = vmul.f32 %v740, 0.25
    %v746 = vmul.f32 %v742, 0.25
    %v747 = vsub.f32 %v711, %v743
    %v748 = vsub.f32 %v712, %v744
    %v749 = vsub.f32 %v713, %v745
    %v750 = vsub.f32 %v714, %v746
    %v751 = vsel %vm730, %v747, 0.0
    %v752 = vsel %vm730, %v748, 0.0
    %v753 = vsel %vm730, %v749, 0.0
    %v754 = vsel %vm730, %v750, 0.0
    %v755 = vmul.f32 %v751, %v751
    %v756 = vmul.f32 %v752, %v752
    %v757 = vmul.f32 %v753, %v753
    %v758 = vmul.f32 %v754, %v754
    %759 = vadd.xlane.f32.xlu0 %v755
    %v760 = vpop.xlane.xlu0 %759
    %761 = vadd.xlane.f32.xlu0 %v756
    %v762 = vpop.xlane.xlu0 %761
    %763 = vadd.xlane.f32.xlu0 %v757
    %v764 = vpop.xlane.xlu0 %763
    %765 = vadd.xlane.f32.xlu0 %v758
    %v766 = vpop.xlane.xlu0 %765
    %v767 = vmul.f32 %v760, 0.25
    %v768 = vmul.f32 %v762, 0.25
    %v769 = vmul.f32 %v764, 0.25
    %v770 = vmul.f32 %v766, 0.25
    %v771 = vadd.f32 %v767, 1e-05
    %v772 = vadd.f32 %v768, 1e-05
    %v773 = vadd.f32 %v769, 1e-05
    %v774 = vadd.f32 %v770, 1e-05
    %v775 = vrsqrt.pop %v771
    %v776 = vrsqrt.pop %v772
    %v777 = vrsqrt.pop %v773
    %v778 = vrsqrt.pop %v774
    %v779 = vmul.f32 %v747, %v775
    %v780 = vmul.f32 %v748, %v776
    %v781 = vmul.f32 %v749, %v777
    %v782 = vmul.f32 %v750, %v778
    %783 = vset.pattern.permute.xlu0 13
    %784 = vperm.xlu0 %783, %v67
    %v785 = vpop.permute.xlu0 %784
    %787 = vset.pattern.permute.xlu0 13
    %788 = vperm.xlu0 %787, %v68
    %v789 = vpop.permute.xlu0 %788
    %791 = vset.pattern.permute.xlu0 13
    %792 = vperm.xlu0 %791, %v69
    %v793 = vpop.permute.xlu0 %792
    %795 = vset.pattern.permute.xlu0 13
    %796 = vperm.xlu0 %795, %v70
    %v797 = vpop.permute.xlu0 %796
    %v799 = vmul.f32 %v779, %v785
    %v800 = vmul.f32 %v780, %v789
    %v801 = vmul.f32 %v781, %v793
    %v802 = vmul.f32 %v782, %v797
    %803 = vset.pattern.permute.xlu0 14
    %804 = vperm.xlu0 %803, %v67
    %v805 = vpop.permute.xlu0 %804
    %807 = vset.pattern.permute.xlu0 14
    %808 = vperm.xlu0 %807, %v68
    %v809 = vpop.permute.xlu0 %808
    %811 = vset.pattern.permute.xlu0 14
    %812 = vperm.xlu0 %811, %v69
    %v813 = vpop.permute.xlu0 %812
    %815 = vset.pattern.permute.xlu0 14
    %816 = vperm.xlu0 %815, %v70
    %v817 = vpop.permute.xlu0 %816
    %v819 = vadd.f32 %v799, %v805
    %v820 = vadd.f32 %v800, %v809
    %v821 = vadd.f32 %v801, %v813
    %v822 = vadd.f32 %v802, %v817
    %vm823 = vcmp.gt.f32.partialorder %v819, 0.0
    %vm824 = vcmp.gt.f32.partialorder %v820, 0.0
    %vm825 = vcmp.gt.f32.partialorder %v821, 0.0
    %vm826 = vcmp.gt.f32.partialorder %v822, 0.0
    %v827 = vmul.f32 %v819, 0.01
    %v828 = vmul.f32 %v820, 0.01
    %v829 = vmul.f32 %v821, 0.01
    %v830 = vmul.f32 %v822, 0.01
    %v831 = vsel %vm823, %v819, %v827
    %v832 = vsel %vm824, %v820, %v828
    %v833 = vsel %vm825, %v821, %v829
    %v834 = vsel %vm826, %v822, %v830
    %v835 = vlaneseq
    %v836 = vshrl.u32 %v835, 7
    %v837 = vadd.s32 %v836, 8
    %v838 = vadd.s32 %v836, 16
    %v839 = vadd.s32 %v836, 24
    %v840 = vadd.s32 %v836, 32
    %v841 = vadd.s32 %v836, 40
    %v842 = vadd.s32 %v836, 48
    %v843 = vadd.s32 %v836, 56
    %v844 = vadd.s32 %v836, 64
    %v845 = vadd.s32 %v836, 72
    %v846 = vadd.s32 %v836, 80
    %v847 = vadd.s32 %v836, 88
    %v848 = vadd.s32 %v836, 96
    %v849 = vadd.s32 %v836, 104
    %v850 = vadd.s32 %v836, 112
    %v851 = vadd.s32 %v836, 120
    %v852 = vmul.u32 %v53, 16
    %vm853 = vcmp.eq.s32.totalorder %v836, %v852
    %vm854 = vcmp.eq.s32.totalorder %v837, %v852
    %vm855 = vcmp.eq.s32.totalorder %v838, %v852
    %vm856 = vcmp.eq.s32.totalorder %v839, %v852
    %vm857 = vcmp.eq.s32.totalorder %v840, %v852
    %vm858 = vcmp.eq.s32.totalorder %v841, %v852
    %vm859 = vcmp.eq.s32.totalorder %v842, %v852
    %vm860 = vcmp.eq.s32.totalorder %v843, %v852
    %vm861 = vcmp.eq.s32.totalorder %v844, %v852
    %vm862 = vcmp.eq.s32.totalorder %v845, %v852
    %vm863 = vcmp.eq.s32.totalorder %v846, %v852
    %vm864 = vcmp.eq.s32.totalorder %v847, %v852
    %vm865 = vcmp.eq.s32.totalorder %v848, %v852
    %vm866 = vcmp.eq.s32.totalorder %v849, %v852
    %vm867 = vcmp.eq.s32.totalorder %v850, %v852
    %vm868 = vcmp.eq.s32.totalorder %v851, %v852
    %v869 = vsel %vm853, 1.0, 0.0
    %v870 = vsel %vm854, 1.0, 0.0
    %v871 = vsel %vm855, 1.0, 0.0
    %v872 = vsel %vm856, 1.0, 0.0
    %v873 = vsel %vm857, 1.0, 0.0
    %v874 = vsel %vm858, 1.0, 0.0
    %v875 = vsel %vm859, 1.0, 0.0
    %v876 = vsel %vm860, 1.0, 0.0
    %v877 = vsel %vm861, 1.0, 0.0
    %v878 = vsel %vm862, 1.0, 0.0
    %v879 = vsel %vm863, 1.0, 0.0
    %v880 = vsel %vm864, 1.0, 0.0
    %v881 = vsel %vm865, 1.0, 0.0
    %v882 = vsel %vm866, 1.0, 0.0
    %v883 = vsel %vm867, 1.0, 0.0
    %v884 = vsel %vm868, 1.0, 0.0
    %885 = vmatprep.subr.mxu0 0.0
    %886 = vmatpush1.msra.mxu0 %v869
    %887 = vmatprep.subr.mxu0 0.0
    %888 = vmatpush1.msra.mxu0 %v870
    %889 = vmatprep.subr.mxu0 0.0
    %890 = vmatpush1.msra.mxu0 %v871
    %891 = vmatprep.subr.mxu0 0.0
    %892 = vmatpush1.msra.mxu0 %v872
    %893 = vmatprep.subr.mxu0 0.0
    %894 = vmatpush1.msra.mxu0 %v873
    %895 = vmatprep.subr.mxu0 0.0
    %896 = vmatpush1.msra.mxu0 %v874
    %897 = vmatprep.subr.mxu0 0.0
    %898 = vmatpush1.msra.mxu0 %v875
    %899 = vmatprep.subr.mxu0 0.0
    %900 = vmatpush1.msra.mxu0 %v876
    %901 = vmatprep.subr.mxu0 0.0
    %902 = vmatpush1.msra.mxu0 %v877
    %903 = vmatprep.subr.mxu0 0.0
    %904 = vmatpush1.msra.mxu0 %v878
    %905 = vmatprep.subr.mxu0 0.0
    %906 = vmatpush1.msra.mxu0 %v879
    %907 = vmatprep.subr.mxu0 0.0
    %908 = vmatpush1.msra.mxu0 %v880
    %909 = vmatprep.subr.mxu0 0.0
    %910 = vmatpush1.msra.mxu0 %v881
    %911 = vmatprep.subr.mxu0 0.0
    %912 = vmatpush1.msra.mxu0 %v882
    %913 = vmatprep.subr.mxu0 0.0
    %914 = vmatpush1.msra.mxu0 %v883
    %915 = vmatprep.subr.mxu0 0.0
    %916 = vmatpush1.msra.mxu0 %v884
    %917 = vmatprep.subr.mxu0 0.0
    %918 = vmatpush1.msra.mxu0 0.0
    %919 = vmatprep.subr.mxu0 0.0
    %920 = vmatpush1.msra.mxu0 0.0
    %921 = vmatprep.subr.mxu0 0.0
    %922 = vmatpush1.msra.mxu0 0.0
    %923 = vmatprep.subr.mxu0 0.0
    %924 = vmatpush1.msra.mxu0 0.0
    %925 = vmatprep.subr.mxu0 0.0
    %926 = vmatpush1.msra.mxu0 0.0
    %927 = vmatprep.subr.mxu0 0.0
    %928 = vmatpush1.msra.mxu0 0.0
    %929 = vmatprep.subr.mxu0 0.0
    %930 = vmatpush1.msra.mxu0 0.0
    %931 = vmatprep.subr.mxu0 0.0
    %932 = vmatpush1.msra.mxu0 0.0
    %933 = vmatprep.subr.mxu0 0.0
    %934 = vmatpush1.msra.mxu0 0.0
    %935 = vmatprep.subr.mxu0 0.0
    %936 = vmatpush1.msra.mxu0 0.0
    %937 = vmatprep.subr.mxu0 0.0
    %938 = vmatpush1.msra.mxu0 0.0
    %939 = vmatprep.subr.mxu0 0.0
    %940 = vmatpush1.msra.mxu0 0.0
    %941 = vmatprep.subr.mxu0 0.0
    %942 = vmatpush1.msra.mxu0 0.0
    %943 = vmatprep.subr.mxu0 0.0
    %944 = vmatpush1.msra.mxu0 0.0
    %945 = vmatprep.subr.mxu0 0.0
    %946 = vmatpush1.msra.mxu0 0.0
    %947 = vmatprep.subr.mxu0 0.0
    %948 = vmatpush1.msra.mxu0 0.0
    %949 = vmatprep.mubr.f32.mxu0 0.0
    %950 = vmatmul.mubr.f32.gmra.mrb[0].mxu0 %v831
    %v951 = vpop.f32.mrb[0].mxu0
    %v952 = vadd.f32 0.0, %v951
    %v953 = vpop.f32.mrb[0].mxu0
    %954 = vmatprep.mubr.f32.mxu0 0.0
    %955 = vmatmul.mubr.f32.gmra.mrb[0].mxu0 %v832
    %v956 = vpop.f32.mrb[0].mxu0
    %v957 = vadd.f32 0.0, %v956
    %v958 = vpop.f32.mrb[0].mxu0
    %959 = vmatprep.mubr.f32.mxu0 0.0
    %960 = vmatmul.mubr.f32.gmra.mrb[0].mxu0 %v833
    %v961 = vpop.f32.mrb[0].mxu0
    %v962 = vadd.f32 0.0, %v961
    %v963 = vpop.f32.mrb[0].mxu0
    %964 = vmatprep.mubr.f32.mxu0 0.0
    %965 = vmatmul.mubr.f32.gmra.mrb[0].mxu0 %v834
    %v966 = vpop.f32.mrb[0].mxu0
    %v967 = vadd.f32 0.0, %v966
    %v968 = vpop.f32.mrb[0].mxu0
    %969 = vdwg.mxu0
    %v970 = vadd.s32 %v852, 8
    %vm971 = vcmp.eq.s32.totalorder %v836, %v970
    %vm972 = vcmp.eq.s32.totalorder %v837, %v970
    %vm973 = vcmp.eq.s32.totalorder %v838, %v970
    %vm974 = vcmp.eq.s32.totalorder %v839, %v970
    %vm975 = vcmp.eq.s32.totalorder %v840, %v970
    %vm976 = vcmp.eq.s32.totalorder %v841, %v970
    %vm977 = vcmp.eq.s32.totalorder %v842, %v970
    %vm978 = vcmp.eq.s32.totalorder %v843, %v970
    %vm979 = vcmp.eq.s32.totalorder %v844, %v970
    %vm980 = vcmp.eq.s32.totalorder %v845, %v970
    %vm981 = vcmp.eq.s32.totalorder %v846, %v970
    %vm982 = vcmp.eq.s32.totalorder %v847, %v970
    %vm983 = vcmp.eq.s32.totalorder %v848, %v970
    %vm984 = vcmp.eq.s32.totalorder %v849, %v970
    %vm985 = vcmp.eq.s32.totalorder %v850, %v970
    %vm986 = vcmp.eq.s32.totalorder %v851, %v970
    %v987 = vsel %vm971, 1.0, 0.0
    %v988 = vsel %vm972, 1.0, 0.0
    %v989 = vsel %vm973, 1.0, 0.0
    %v990 = vsel %vm974, 1.0, 0.0
    %v991 = vsel %vm975, 1.0, 0.0
    %v992 = vsel %vm976, 1.0, 0.0
    %v993 = vsel %vm977, 1.0, 0.0
    %v994 = vsel %vm978, 1.0, 0.0
    %v995 = vsel %vm979, 1.0, 0.0
    %v996 = vsel %vm980, 1.0, 0.0
    %v997 = vsel %vm981, 1.0, 0.0
    %v998 = vsel %vm982, 1.0, 0.0
    %v999 = vsel %vm983, 1.0, 0.0
    %v1000 = vsel %vm984, 1.0, 0.0
    %v1001 = vsel %vm985, 1.0, 0.0
    %v1002 = vsel %vm986, 1.0, 0.0
    %1003 = vmatprep.subr.mxu0 0.0
    %1004 = vmatpush1.msra.mxu0 %v987
    %1005 = vmatprep.subr.mxu0 0.0
    %1006 = vmatpush1.msra.mxu0 %v988
    %1007 = vmatprep.subr.mxu0 0.0
    %1008 = vmatpush1.msra.mxu0 %v989
    %1009 = vmatprep.subr.mxu0 0.0
    %1010 = vmatpush1.msra.mxu0 %v990
    %1011 = vmatprep.subr.mxu0 0.0
    %1012 = vmatpush1.msra.mxu0 %v991
    %1013 = vmatprep.subr.mxu0 0.0
    %1014 = vmatpush1.msra.mxu0 %v992
    %1015 = vmatprep.subr.mxu0 0.0
    %1016 = vmatpush1.msra.mxu0 %v993
    %1017 = vmatprep.subr.mxu0 0.0
    %1018 = vmatpush1.msra.mxu0 %v994
    %1019 = vmatprep.subr.mxu0 0.0
    %1020 = vmatpush1.msra.mxu0 %v995
    %1021 = vmatprep.subr.mxu0 0.0
    %1022 = vmatpush1.msra.mxu0 %v996
    %1023 = vmatprep.subr.mxu0 0.0
    %1024 = vmatpush1.msra.mxu0 %v997
    %1025 = vmatprep.subr.mxu0 0.0
    %1026 = vmatpush1.msra.mxu0 %v998
    %1027 = vmatprep.subr.mxu0 0.0
    %1028 = vmatpush1.msra.mxu0 %v999
    %1029 = vmatprep.subr.mxu0 0.0
    %1030 = vmatpush1.msra.mxu0 %v1000
    %1031 = vmatprep.subr.mxu0 0.0
    %1032 = vmatpush1.msra.mxu0 %v1001
    %1033 = vmatprep.subr.mxu0 0.0
    %1034 = vmatpush1.msra.mxu0 %v1002
    %1035 = vmatprep.subr.mxu0 0.0
    %1036 = vmatpush1.msra.mxu0 0.0
    %1037 = vmatprep.subr.mxu0 0.0
    %1038 = vmatpush1.msra.mxu0 0.0
    %1039 = vmatprep.subr.mxu0 0.0
    %1040 = vmatpush1.msra.mxu0 0.0
    %1041 = vmatprep.subr.mxu0 0.0
    %1042 = vmatpush1.msra.mxu0 0.0
    %1043 = vmatprep.subr.mxu0 0.0
    %1044 = vmatpush1.msra.mxu0 0.0
    %1045 = vmatprep.subr.mxu0 0.0
    %1046 = vmatpush1.msra.mxu0 0.0
    %1047 = vmatprep.subr.mxu0 0.0
    %1048 = vmatpush1.msra.mxu0 0.0
    %1049 = vmatprep.subr.mxu0 0.0
    %1050 = vmatpush1.msra.mxu0 0.0
    %1051 = vmatprep.subr.mxu0 0.0
    %1052 = vmatpush1.msra.mxu0 0.0
    %1053 = vmatprep.subr.mxu0 0.0
    %1054 = vmatpush1.msra.mxu0 0.0
    %1055 = vmatprep.subr.mxu0 0.0
    %1056 = vmatpush1.msra.mxu0 0.0
    %1057 = vmatprep.subr.mxu0 0.0
    %1058 = vmatpush1.msra.mxu0 0.0
    %1059 = vmatprep.subr.mxu0 0.0
    %1060 = vmatpush1.msra.mxu0 0.0
    %1061 = vmatprep.subr.mxu0 0.0
    %1062 = vmatpush1.msra.mxu0 0.0
    %1063 = vmatprep.subr.mxu0 0.0
    %1064 = vmatpush1.msra.mxu0 0.0
    %1065 = vmatprep.subr.mxu0 0.0
    %1066 = vmatpush1.msra.mxu0 0.0
    %1067 = vmatprep.mubr.f32.mxu0 0.0
    %1068 = vmatmul.mubr.f32.gmra.mrb[0].mxu0 %v831
    %v1069 = vpop.f32.mrb[0].mxu0
    %v1070 = vadd.f32 0.0, %v1069
    %v1071 = vpop.f32.mrb[0].mxu0
    %1072 = vmatprep.mubr.f32.mxu0 0.0
    %1073 = vmatmul.mubr.f32.gmra.mrb[0].mxu0 %v832
    %v1074 = vpop.f32.mrb[0].mxu0
    %v1075 = vadd.f32 0.0, %v1074
    %v1076 = vpop.f32.mrb[0].mxu0
    %1077 = vmatprep.mubr.f32.mxu0 0.0
    %1078 = vmatmul.mubr.f32.gmra.mrb[0].mxu0 %v833
    %v1079 = vpop.f32.mrb[0].mxu0
    %v1080 = vadd.f32 0.0, %v1079
    %v1081 = vpop.f32.mrb[0].mxu0
    %1082 = vmatprep.mubr.f32.mxu0 0.0
    %1083 = vmatmul.mubr.f32.gmra.mrb[0].mxu0 %v834
    %v1084 = vpop.f32.mrb[0].mxu0
    %v1085 = vadd.f32 0.0, %v1084
    %v1086 = vpop.f32.mrb[0].mxu0
    %1087 = vdwg.mxu0
    %v1088 = vld [vmem:[%s4] sm:$0xff]
    %v1089 = vld [vmem:[%s4 + $0x8] sm:$0xff]
    %v1090 = vld [vmem:[%s4 + $0x10] sm:$0xff]
    %v1091 = vld [vmem:[%s4 + $0x18] sm:$0xff]
    %1092 = vset.pattern.permute.xlu0 15
    %1093 = vperm.xlu0 %1092, %v67
    %v1094 = vpop.permute.xlu0 %1093
    %1096 = vset.pattern.permute.xlu0 15
    %1097 = vperm.xlu0 %1096, %v68
    %v1098 = vpop.permute.xlu0 %1097
    %1100 = vset.pattern.permute.xlu0 15
    %1101 = vperm.xlu0 %1100, %v69
    %v1102 = vpop.permute.xlu0 %1101
    %1104 = vset.pattern.permute.xlu0 15
    %1105 = vperm.xlu0 %1104, %v70
    %v1106 = vpop.permute.xlu0 %1105
    %vm1108 = vcmask 523264
    %v1110 = vsel %vm1108, %v1088, 0
    %v1113 = vsel %vm1108, %v1089, 0
    %v1116 = vsel %vm1108, %v1090, 0
    %v1119 = vsel %vm1108, %v1091, 0
    %1121 = vmatprep.subr.mxu0 0.0
    %1122 = vmatpush1.msra.mxu0 %v952
    %1123 = vmatprep.subr.mxu0 0.0
    %1124 = vmatpush1.msra.mxu0 %v957
    %1125 = vmatprep.subr.mxu0 0.0
    %1126 = vmatpush1.msra.mxu0 %v962
    %1127 = vmatprep.subr.mxu0 0.0
    %1128 = vmatpush1.msra.mxu0 %v967
    %1129 = vmatprep.subr.mxu0 0.0
    %1130 = vmatpush1.msra.mxu0 %v1070
    %1131 = vmatprep.subr.mxu0 0.0
    %1132 = vmatpush1.msra.mxu0 %v1075
    %1133 = vmatprep.subr.mxu0 0.0
    %1134 = vmatpush1.msra.mxu0 %v1080
    %1135 = vmatprep.subr.mxu0 0.0
    %1136 = vmatpush1.msra.mxu0 %v1085
    %1137 = vmatprep.subr.mxu0 0.0
    %1138 = vmatpush1.msra.mxu0 0.0
    %1139 = vmatprep.subr.mxu0 0.0
    %1140 = vmatpush1.msra.mxu0 0.0
    %1141 = vmatprep.subr.mxu0 0.0
    %1142 = vmatpush1.msra.mxu0 0.0
    %1143 = vmatprep.subr.mxu0 0.0
    %1144 = vmatpush1.msra.mxu0 0.0
    %1145 = vmatprep.subr.mxu0 0.0
    %1146 = vmatpush1.msra.mxu0 0.0
    %1147 = vmatprep.subr.mxu0 0.0
    %1148 = vmatpush1.msra.mxu0 0.0
    %1149 = vmatprep.subr.mxu0 0.0
    %1150 = vmatpush1.msra.mxu0 0.0
    %1151 = vmatprep.subr.mxu0 0.0
    %1152 = vmatpush1.msra.mxu0 0.0
    %1153 = vmatprep.subr.mxu0 0.0
    %1154 = vmatpush1.msra.mxu0 0.0
    %1155 = vmatprep.subr.mxu0 0.0
    %1156 = vmatpush1.msra.mxu0 0.0
    %1157 = vmatprep.subr.mxu0 0.0
    %1158 = vmatpush1.msra.mxu0 0.0
    %1159 = vmatprep.subr.mxu0 0.0
    %1160 = vmatpush1.msra.mxu0 0.0
    %1161 = vmatprep.subr.mxu0 0.0
    %1162 = vmatpush1.msra.mxu0 0.0
    %1163 = vmatprep.subr.mxu0 0.0
    %1164 = vmatpush1.msra.mxu0 0.0
    %1165 = vmatprep.subr.mxu0 0.0
    %1166 = vmatpush1.msra.mxu0 0.0
    %1167 = vmatprep.subr.mxu0 0.0
    %1168 = vmatpush1.msra.mxu0 0.0
    %1169 = vmatprep.subr.mxu0 0.0
    %1170 = vmatpush1.msra.mxu0 0.0
    %1171 = vmatprep.subr.mxu0 0.0
    %1172 = vmatpush1.msra.mxu0 0.0
    %1173 = vmatprep.subr.mxu0 0.0
    %1174 = vmatpush1.msra.mxu0 0.0
    %1175 = vmatprep.subr.mxu0 0.0
    %1176 = vmatpush1.msra.mxu0 0.0
    %1177 = vmatprep.subr.mxu0 0.0
    %1178 = vmatpush1.msra.mxu0 0.0
    %1179 = vmatprep.subr.mxu0 0.0
    %1180 = vmatpush1.msra.mxu0 0.0
    %1181 = vmatprep.subr.mxu0 0.0
    %1182 = vmatpush1.msra.mxu0 0.0
    %1183 = vmatprep.subr.mxu0 0.0
    %1184 = vmatpush1.msra.mxu0 0.0
    %1185 = vmatprep.mubr.f32.mxu0 0.0
    %1186 = vmatmul.mubr.f32.gmra.mrb[0].mxu0 %v1110
    %v1187 = vpop.f32.mrb[0].mxu0
    %v1188 = vadd.f32 %v1094, %v1187
    %v1189 = vpop.f32.mrb[0].mxu0
    %1190 = vmatprep.mubr.f32.mxu0 0.0
    %1191 = vmatmul.mubr.f32.gmra.mrb[0].mxu0 %v1113
    %v1192 = vpop.f32.mrb[0].mxu0
    %v1193 = vadd.f32 %v1098, %v1192
    %v1194 = vpop.f32.mrb[0].mxu0
    %1195 = vmatprep.mubr.f32.mxu0 0.0
    %1196 = vmatmul.mubr.f32.gmra.mrb[0].mxu0 %v1116
    %v1197 = vpop.f32.mrb[0].mxu0
    %v1198 = vadd.f32 %v1102, %v1197
    %v1199 = vpop.f32.mrb[0].mxu0
    %1200 = vmatprep.mubr.f32.mxu0 0.0
    %1201 = vmatmul.mubr.f32.gmra.mrb[0].mxu0 %v1119
    %v1202 = vpop.f32.mrb[0].mxu0
    %v1203 = vadd.f32 %v1106, %v1202
    %v1204 = vpop.f32.mrb[0].mxu0
    %1205 = vdwg.mxu0
    %vm1206 = vcmask 15360
    %v1207 = vsel %vm1206, %v1188, 0.0
    %1208 = vadd.xlane.f32.xlu0 %v1207
    %v1209 = vpop.xlane.xlu0 %1208
    %v1210 = vsel %vm1206, %v1193, 0.0
    %1211 = vadd.xlane.f32.xlu0 %v1210
    %v1212 = vpop.xlane.xlu0 %1211
    %v1213 = vsel %vm1206, %v1198, 0.0
    %1214 = vadd.xlane.f32.xlu0 %v1213
    %v1215 = vpop.xlane.xlu0 %1214
    %v1216 = vsel %vm1206, %v1203, 0.0
    %1217 = vadd.xlane.f32.xlu0 %v1216
    %v1218 = vpop.xlane.xlu0 %1217
    %v1219 = vmul.f32 %v1209, 0.5
    %v1220 = vmul.f32 %v1212, 0.5
    %v1221 = vmul.f32 %v1215, 0.5
    %v1222 = vmul.f32 %v1218, 0.5
    %v1223 = vsub.f32 %v1188, %v1219
    %v1224 = vsub.f32 %v1193, %v1220
    %v1225 = vsub.f32 %v1198, %v1221
    %v1226 = vsub.f32 %v1203, %v1222
    %v1227 = vmul.f32 %v1223, %v1223
    %v1228 = vmul.f32 %v1224, %v1224
    %v1229 = vmul.f32 %v1225, %v1225
    %v1230 = vmul.f32 %v1226, %v1226
    %v1231 = vsel %vm1206, %v1227, 0.0
    %1232 = vadd.xlane.f32.xlu0 %v1231
    %v1233 = vpop.xlane.xlu0 %1232
    %v1234 = vsel %vm1206, %v1228, 0.0
    %1235 = vadd.xlane.f32.xlu0 %v1234
    %v1236 = vpop.xlane.xlu0 %1235
    %v1237 = vsel %vm1206, %v1229, 0.0
    %1238 = vadd.xlane.f32.xlu0 %v1237
    %v1239 = vpop.xlane.xlu0 %1238
    %v1240 = vsel %vm1206, %v1230, 0.0
    %1241 = vadd.xlane.f32.xlu0 %v1240
    %v1242 = vpop.xlane.xlu0 %1241
    %v1243 = vmul.f32 %v1233, 0.5
    %v1244 = vmul.f32 %v1236, 0.5
    %v1245 = vmul.f32 %v1239, 0.5
    %v1246 = vmul.f32 %v1242, 0.5
    %v1247 = vadd.f32 %v1243, 1e-05
    %v1248 = vadd.f32 %v1244, 1e-05
    %v1249 = vadd.f32 %v1245, 1e-05
    %v1250 = vadd.f32 %v1246, 1e-05
    %v1251 = vrsqrt.pop %v1247
    %v1252 = vrsqrt.pop %v1248
    %v1253 = vrsqrt.pop %v1249
    %v1254 = vrsqrt.pop %v1250
    %v1255 = vmul.f32 %v1223, %v1251
    %v1256 = vmul.f32 %v1224, %v1252
    %v1257 = vmul.f32 %v1225, %v1253
    %v1258 = vmul.f32 %v1226, %v1254
    %1259 = vset.pattern.permute.xlu0 16
    %1260 = vperm.xlu0 %1259, %v67
    %v1261 = vpop.permute.xlu0 %1260
    %1263 = vset.pattern.permute.xlu0 16
    %1264 = vperm.xlu0 %1263, %v68
    %v1265 = vpop.permute.xlu0 %1264
    %1267 = vset.pattern.permute.xlu0 16
    %1268 = vperm.xlu0 %1267, %v69
    %v1269 = vpop.permute.xlu0 %1268
    %1271 = vset.pattern.permute.xlu0 16
    %1272 = vperm.xlu0 %1271, %v70
    %v1273 = vpop.permute.xlu0 %1272
    %v1275 = vmul.f32 %v1255, %v1261
    %v1276 = vmul.f32 %v1256, %v1265
    %v1277 = vmul.f32 %v1257, %v1269
    %v1278 = vmul.f32 %v1258, %v1273
    %1279 = vset.pattern.permute.xlu0 17
    %1280 = vperm.xlu0 %1279, %v67
    %v1281 = vpop.permute.xlu0 %1280
    %1283 = vset.pattern.permute.xlu0 17
    %1284 = vperm.xlu0 %1283, %v68
    %v1285 = vpop.permute.xlu0 %1284
    %1287 = vset.pattern.permute.xlu0 17
    %1288 = vperm.xlu0 %1287, %v69
    %v1289 = vpop.permute.xlu0 %1288
    %1291 = vset.pattern.permute.xlu0 17
    %1292 = vperm.xlu0 %1291, %v70
    %v1293 = vpop.permute.xlu0 %1292
    %v1295 = vadd.f32 %v1275, %v1281
    %v1296 = vadd.f32 %v1276, %v1285
    %v1297 = vadd.f32 %v1277, %v1289
    %v1298 = vadd.f32 %v1278, %v1293
    %vm1299 = vcmp.gt.f32.partialorder %v1295, 0.0
    %vm1300 = vcmp.gt.f32.partialorder %v1296, 0.0
    %vm1301 = vcmp.gt.f32.partialorder %v1297, 0.0
    %vm1302 = vcmp.gt.f32.partialorder %v1298, 0.0
    %v1303 = vmul.f32 %v1295, 0.01
    %v1304 = vmul.f32 %v1296, 0.01
    %v1305 = vmul.f32 %v1297, 0.01
    %v1306 = vmul.f32 %v1298, 0.01
    %v1307 = vsel %vm1299, %v1295, %v1303
    %v1308 = vsel %vm1300, %v1296, %v1304
    %v1309 = vsel %vm1301, %v1297, %v1305
    %v1310 = vsel %vm1302, %v1298, %v1306
    %v1311 = vld [vmem:[#allocation4] sm:$0xff]
    %v1312 = vld [vmem:[#allocation4 + $0x8] sm:$0x3]
    %1313 = vset.pattern.permute.xlu0 18
    %1314 = vperm.xlu0 %1313, %v67
    %v1315 = vpop.permute.xlu0 %1314
    %1317 = vset.pattern.permute.xlu0 18
    %1318 = vperm.xlu0 %1317, %v68
    %v1319 = vpop.permute.xlu0 %1318
    %vm1321 = vcmask 261120
    %v1323 = vsel %vm1321, %v1311, 0
    %v1326 = vsel %vm1321, %v1312, 0
    %1328 = vmatprep.subr.mxu0 0.0
    %1329 = vmatpush1.msra.mxu0 %v1307
    %1330 = vmatprep.subr.mxu0 0.0
    %1331 = vmatpush1.msra.mxu0 %v1308
    %1332 = vmatprep.subr.mxu0 0.0
    %1333 = vmatpush1.msra.mxu0 %v1309
    %1334 = vmatprep.subr.mxu0 0.0
    %1335 = vmatpush1.msra.mxu0 %v1310
    %1336 = vmatprep.subr.mxu0 0.0
    %1337 = vmatpush1.msra.mxu0 0.0
    %1338 = vmatprep.subr.mxu0 0.0
    %1339 = vmatpush1.msra.mxu0 0.0
    %1340 = vmatprep.subr.mxu0 0.0
    %1341 = vmatpush1.msra.mxu0 0.0
    %1342 = vmatprep.subr.mxu0 0.0
    %1343 = vmatpush1.msra.mxu0 0.0
    %1344 = vmatprep.subr.mxu0 0.0
    %1345 = vmatpush1.msra.mxu0 0.0
    %1346 = vmatprep.subr.mxu0 0.0
    %1347 = vmatpush1.msra.mxu0 0.0
    %1348 = vmatprep.subr.mxu0 0.0
    %1349 = vmatpush1.msra.mxu0 0.0
    %1350 = vmatprep.subr.mxu0 0.0
    %1351 = vmatpush1.msra.mxu0 0.0
    %1352 = vmatprep.subr.mxu0 0.0
    %1353 = vmatpush1.msra.mxu0 0.0
    %1354 = vmatprep.subr.mxu0 0.0
    %1355 = vmatpush1.msra.mxu0 0.0
    %1356 = vmatprep.subr.mxu0 0.0
    %1357 = vmatpush1.msra.mxu0 0.0
    %1358 = vmatprep.subr.mxu0 0.0
    %1359 = vmatpush1.msra.mxu0 0.0
    %1360 = vmatprep.subr.mxu0 0.0
    %1361 = vmatpush1.msra.mxu0 0.0
    %1362 = vmatprep.subr.mxu0 0.0
    %1363 = vmatpush1.msra.mxu0 0.0
    %1364 = vmatprep.subr.mxu0 0.0
    %1365 = vmatpush1.msra.mxu0 0.0
    %1366 = vmatprep.subr.mxu0 0.0
    %1367 = vmatpush1.msra.mxu0 0.0
    %1368 = vmatprep.subr.mxu0 0.0
    %1369 = vmatpush1.msra.mxu0 0.0
    %1370 = vmatprep.subr.mxu0 0.0
    %1371 = vmatpush1.msra.mxu0 0.0
    %1372 = vmatprep.subr.mxu0 0.0
    %1373 = vmatpush1.msra.mxu0 0.0
    %1374 = vmatprep.subr.mxu0 0.0
    %1375 = vmatpush1.msra.mxu0 0.0
    %1376 = vmatprep.subr.mxu0 0.0
    %1377 = vmatpush1.msra.mxu0 0.0
    %1378 = vmatprep.subr.mxu0 0.0
    %1379 = vmatpush1.msra.mxu0 0.0
    %1380 = vmatprep.subr.mxu0 0.0
    %1381 = vmatpush1.msra.mxu0 0.0
    %1382 = vmatprep.subr.mxu0 0.0
    %1383 = vmatpush1.msra.mxu0 0.0
    %1384 = vmatprep.subr.mxu0 0.0
    %1385 = vmatpush1.msra.mxu0 0.0
    %1386 = vmatprep.subr.mxu0 0.0
    %1387 = vmatpush1.msra.mxu0 0.0
    %1388 = vmatprep.subr.mxu0 0.0
    %1389 = vmatpush1.msra.mxu0 0.0
    %1390 = vmatprep.subr.mxu0 0.0
    %1391 = vmatpush1.msra.mxu0 0.0
    %1392 = vmatprep.mubr.f32.mxu0 0.0
    %1393 = vmatmul.mubr.f32.gmra.mrb[0].mxu0 %v1323
    %v1394 = vpop.f32.mrb[0].mxu0
    %v1395 = vadd.f32 %v1315, %v1394
    %v1396 = vpop.f32.mrb[0].mxu0
    %1397 = vmatprep.mubr.f32.mxu0 0.0
    %1398 = vmatmul.mubr.f32.gmra.mrb[0].mxu0 %v1326
    %v1399 = vpop.f32.mrb[0].mxu0
    %v1400 = vadd.f32 %v1319, %v1399
    %v1401 = vpop.f32.mrb[0].mxu0
    %1402 = vdwg.mxu0
    %1403 = vst.msk [vmem:[%s7] sm:$0xff] %vm1206, %v1395
    %vm1404 = vcmask 9216
    %1405 = vst.msk [vmem:[%s7 + $0x8] sm:$0x3] %vm1404, %v1400
    // Predicated region
    $region38: #{fcnn_forward_pallas.1} parent=1 // pred_check
      _
    $region39: #{fcnn_forward_pallas.1} parent=1 // pred_check_branch
      %1407 = sbr.rel (0) target = $region41
    $region40: #{fcnn_forward_pallas.1} parent=1 // pred_region
      _
    $region41: #{fcnn_forward_pallas.1} parent=1 // pred_fallthru
      _
    // Predicated region
    $region42: #{fcnn_forward_pallas.1} parent=1 // pred_check
      _
    $region43: #{fcnn_forward_pallas.1} parent=1 // pred_check_branch
      %1409 = sbr.rel (0) target = $region45
    $region44: #{fcnn_forward_pallas.1} parent=1 // pred_region
      _
    $region45: #{fcnn_forward_pallas.1} parent=1 // pred_fallthru
      _
    %1410 = vsyncpa [#allocation3], 1
    %1411 = vsyncpa [#allocation5], 1

</llo_original>
